<compile_context>
chip_gen: v5e
topology: v5e:2x2
jax: 0.10.0
libtpu: 0.0.40
codegen_flags: <defaults>
</compile_context>

<pallas_src>
import jax
import jax.numpy as jnp
from jax.experimental import pallas as pl
from jax.experimental.pallas import tpu as pltpu


_SQRT_HALF = 0.7071067811865476  # 1/sqrt(2) for exact (erf) GELU
_LN_EPS = 1e-12                  # HuggingFace ConvNext layer_norm_eps default
_HIDDEN = 768                    # ConvNext-tiny pooler width
_LANE = 128
_SUBLANE = 8


def _round_up(n, m):
    return (n + m - 1) // m * m


# ----------------------------------------------------------------------------
# Fused kernel: pooler stand-in + head, one batch tile per grid step.
# ----------------------------------------------------------------------------
def _net_kernel(x_ref, feat_ref, wp_ref, bp_ref, gamma_ref, beta_ref,
                w1a_ref, w1b_ref, b1_ref, w2_ref, b2_ref, out_ref):
    # ---- emulated ConvNext pooler: mean over spatial -> project -> LayerNorm
    x = x_ref[...]                                   # (TB, S, C) f32, channels on lanes
    pooled = jnp.mean(x, axis=1)                     # (TB, C) global average pool (sublane reduce)

    c_in = wp_ref.shape[0]                           # static
    if c_in <= 8:
        # Degenerate-K projection: unrolled VPU FMAs instead of a padded MXU pass.
        wp = wp_ref[...].astype(jnp.float32)         # (C, 768)
        h = bp_ref[...] + pooled[:, 0:1] * wp[0:1, :]
        for c in range(1, c_in):
            h = h + pooled[:, c:c + 1] * wp[c:c + 1, :]
    else:
        # Realistic C (e.g. 768): bf16 x bf16 -> f32 on the MXU.
        h = jnp.dot(pooled.astype(wp_ref.dtype), wp_ref[...],
                    preferred_element_type=jnp.float32) + bp_ref[...]

    mu = jnp.mean(h, axis=-1, keepdims=True)
    var = jnp.mean((h - mu) ** 2, axis=-1, keepdims=True)
    hn = (h - mu) * jax.lax.rsqrt(var + _LN_EPS)
    feature = hn * gamma_ref[...] + beta_ref[...]    # (TB, 768) f32

    # ---- head: cat([feature, feat]) @ W1 + b1 -> GELU -> @ W2 + b2
    # concat-matmul split: feature @ W1[:768] (MXU, bf16) + feat @ W1[768:] (VPU, K=2)
    feat = feat_ref[...]                             # (TB, 2)
    w1b = w1b_ref[...]                               # (2, 64)
    pre = (jnp.dot(feature.astype(w1a_ref.dtype), w1a_ref[...],
                   preferred_element_type=jnp.float32)
           + feat[:, 0:1] * w1b[0:1, :]
           + feat[:, 1:2] * w1b[1:2, :]
           + b1_ref[...])                            # (TB, 64) f32

    # exact (erf-based) GELU, matching torch.nn.GELU() default
    g = 0.5 * pre * (1.0 + jax.lax.erf(pre * _SQRT_HALF))

    # final Linear(64, 1) as a VPU lane-reduction (avoid N=1 MXU matmul)
    y = jnp.sum(g * w2_ref[...], axis=-1, keepdims=True) + b2_ref[...]   # (TB, 1)

    # lane-dense store: fill all 128 lanes, wrapper keeps column 0
    out_ref[...] = jnp.broadcast_to(y, out_ref.shape)


# ----------------------------------------------------------------------------
# Tile / VMEM sizing heuristics (shapes are static at trace time).
# ----------------------------------------------------------------------------
def _pick_batch_tile(batch, spatial, channels):
    """Largest multiple-of-8 batch tile <= 32 whose double-buffered f32 x-block
    stays well within v7x's 64 MiB physical VMEM (v5e/v6e fit trivially)."""
    b8 = _round_up(max(batch, 1), _SUBLANE)

    def x_block_bytes(tb):
        return 2 * tb * _round_up(spatial, _SUBLANE) * _round_up(channels, _LANE) * 4

    for tb in (32, 24, 16, 8):
        if tb <= b8 and x_block_bytes(tb) <= 24 * 2**20:
            return tb
    return _SUBLANE


def _vmem_limit_bytes(tb, spatial, channels):
    """Rough per-call VMEM budget: double-buffered streamed blocks + weights +
    f32 intermediates, with ~2x headroom, clamped to [32 MiB, 96 MiB]."""
    x_blk = tb * _round_up(spatial, _SUBLANE) * _round_up(channels, _LANE) * 4
    io_blk = 2 * tb * _LANE * 4                                 # feat + out tiles
    weights = (_round_up(channels, _SUBLANE) * _HIDDEN * 4      # wp (f32 worst case)
               + 3 * _SUBLANE * _HIDDEN * 4                     # bp / gamma / beta
               + _HIDDEN * _LANE * 2                            # w1a (bf16, lane-padded)
               + 4 * _SUBLANE * _LANE * 4)                      # w1b / b1 / w2 / b2
    inter = 4 * tb * _round_up(_HIDDEN, _LANE) * 4              # h / feature / pre / g
    total = 2 * (x_blk + io_blk + weights) + inter
    return int(min(96 * 2**20, max(32 * 2**20, 2 * total)))


# ----------------------------------------------------------------------------
# Wrapper: batch-tiled pallas_call with auto double-buffering.
# ----------------------------------------------------------------------------
@jax.jit
def net_forward(x, feat, params):
    B, C, H, W = x.shape
    S = H * W
    # channels-last so C sits on the lane axis and S on the sublane axis
    x3 = jnp.transpose(x, (0, 2, 3, 1)).reshape(B, S, C).astype(jnp.float32)
    feat = feat.astype(jnp.float32)

    TB = _pick_batch_tile(B, S, C)
    B_pad = _round_up(B, TB)                 # full blocks only (avoid partial tiles)
    if B_pad != B:
        x3 = jnp.pad(x3, ((0, B_pad - B), (0, 0), (0, 0)))
        feat = jnp.pad(feat, ((0, B_pad - B), (0, 0)))

    const2d = lambda i: (0, 0)               # weights: same block every grid step

    out_padded = pl.pallas_call(
        _net_kernel,
        out_shape=jax.ShapeDtypeStruct((B_pad, _LANE), jnp.float32),
        grid=(B_pad // TB,),
        in_specs=[
            pl.BlockSpec((TB, S, C), lambda i: (i, 0, 0)),      # x, batch-tiled
            pl.BlockSpec((TB, 2), lambda i: (i, 0)),            # feat, batch-tiled
            pl.BlockSpec(params["wp"].shape, const2d),
            pl.BlockSpec(params["bp"].shape, const2d),
            pl.BlockSpec(params["gamma"].shape, const2d),
            pl.BlockSpec(params["beta"].shape, const2d),
            pl.BlockSpec(params["w1a"].shape, const2d),
            pl.BlockSpec(params["w1b"].shape, const2d),
            pl.BlockSpec(params["b1"].shape, const2d),
            pl.BlockSpec(params["w2_row"].shape, const2d),
            pl.BlockSpec(params["b2"].shape, const2d),
        ],
        out_specs=pl.BlockSpec((TB, _LANE), lambda i: (i, 0)),
        compiler_params=pltpu.CompilerParams(
            dimension_semantics=("parallel",),                  # megacore over batch tiles
            vmem_limit_bytes=_vmem_limit_bytes(TB, S, C)),
    )(x3, feat,
      params["wp"], params["bp"], params["gamma"], params["beta"],
      params["w1a"], params["w1b"], params["b1"],
      params["w2_row"], params["b2"])
    return out_padded[:B, :1]                                   # (B, 1)


# ----------------------------------------------------------------------------
# Deterministic parameter init (PyTorch-Linear-style uniform), pre-shaped for
# the kernel (W1 pre-split, biases as (1, N) rows, W2 as a (1, 64) row).
# ----------------------------------------------------------------------------
def init_params(key, in_channels):
    ks = jax.random.split(key, 6)

    def linear_init(kw, kb, fan_in, fan_out):
        bound = 1.0 / jnp.sqrt(fan_in)
        w = jax.random.uniform(kw, (fan_in, fan_out), jnp.float32, -bound, bound)
        b = jax.random.uniform(kb, (fan_out,), jnp.float32, -bound, bound)
        return w, b

    wp, bp = linear_init(ks[0], ks[1], in_channels, _HIDDEN)    # stand-in projection
    w1, b1 = linear_init(ks[2], ks[3], _HIDDEN + 2, 64)         # pre_layer
    w2, b2 = linear_init(ks[4], ks[5], 64, 1)                   # final_layer

    # Big MXU operands in bf16 (halves weight DMA; native MXU dtype).  The tiny-C
    # stand-in projection stays f32 because it runs as VPU FMAs, not on the MXU.
    wp_dtype = jnp.float32 if in_channels <= 8 else jnp.bfloat16
    return dict(
        wp=wp.astype(wp_dtype), bp=bp.reshape(1, _HIDDEN),
        gamma=jnp.ones((1, _HIDDEN), jnp.float32),              # pooler LayerNorm scale
        beta=jnp.zeros((1, _HIDDEN), jnp.float32),              # pooler LayerNorm bias
        w1a=w1[:_HIDDEN, :].astype(jnp.bfloat16),               # multiplies ConvNext feature
        w1b=w1[_HIDDEN:, :],                                    # multiplies the 2-dim feat
        b1=b1.reshape(1, 64),
        w2_row=w2.reshape(1, 64),                               # (64,1) weight as row
        b2=b2.reshape(1, 1),
    )


if __name__ == "__main__":
    key = jax.random.PRNGKey(0)
    k_x, k_feat, k_param = jax.random.split(key, 3)

    B, C, H, W = 2, 4, 16, 16          # small NCHW image batch
    x = jax.random.normal(k_x, (B, C, H, W), jnp.float32)
    feat = jax.random.normal(k_feat, (B, 2), jnp.float32)
    params = init_params(k_param, C)

    out = net_forward(x, feat, params)
    jax.block_until_ready(out)
    assert out.shape == (B, 1) and out.dtype == jnp.float32
    print("KERNEL_OK")
</pallas_src>

<mosaic_0001>
module attributes {stable_mosaic.version = 11 : i64} {
  func.func @_net_kernel(%arg0: i32, %arg1: memref<8x256x4xf32, #tpu.memory_space<vmem>>, %arg2: memref<8x2xf32, #tpu.memory_space<vmem>>, %arg3: memref<4x768xf32, #tpu.memory_space<vmem>>, %arg4: memref<1x768xf32, #tpu.memory_space<vmem>>, %arg5: memref<1x768xf32, #tpu.memory_space<vmem>>, %arg6: memref<1x768xf32, #tpu.memory_space<vmem>>, %arg7: memref<768x64xbf16, #tpu.memory_space<vmem>>, %arg8: memref<2x64xf32, #tpu.memory_space<vmem>>, %arg9: memref<1x64xf32, #tpu.memory_space<vmem>>, %arg10: memref<1x64xf32, #tpu.memory_space<vmem>>, %arg11: memref<1x1xf32, #tpu.memory_space<vmem>>, %arg12: memref<8x128xf32, #tpu.memory_space<vmem>>) attributes {dimension_semantics = [#tpu.dimension_semantics<parallel>], iteration_bounds = array<i64: 1>, scalar_prefetch = 0 : i64, scratch_operands = 0 : i64, tpu.core_type = #tpu.core_type<tc>, window_params = [{transform_indices = @transform_0, window_bounds = array<i64: 8, 256, 4>}, {transform_indices = @transform_1, window_bounds = array<i64: 8, 2>}, {pipeline_mode = #tpu.pipeline_mode<synchronous>, transform_indices = @transform_2, window_bounds = array<i64: 4, 768>}, {pipeline_mode = #tpu.pipeline_mode<synchronous>, transform_indices = @transform_3, window_bounds = array<i64: 1, 768>}, {pipeline_mode = #tpu.pipeline_mode<synchronous>, transform_indices = @transform_4, window_bounds = array<i64: 1, 768>}, {pipeline_mode = #tpu.pipeline_mode<synchronous>, transform_indices = @transform_5, window_bounds = array<i64: 1, 768>}, {pipeline_mode = #tpu.pipeline_mode<synchronous>, transform_indices = @transform_6, window_bounds = array<i64: 768, 64>}, {pipeline_mode = #tpu.pipeline_mode<synchronous>, transform_indices = @transform_7, window_bounds = array<i64: 2, 64>}, {pipeline_mode = #tpu.pipeline_mode<synchronous>, transform_indices = @transform_8, window_bounds = array<i64: 1, 64>}, {pipeline_mode = #tpu.pipeline_mode<synchronous>, transform_indices = @transform_9, window_bounds = array<i64: 1, 64>}, {pipeline_mode = #tpu.pipeline_mode<synchronous>, transform_indices = @transform_10, window_bounds = array<i64: 1, 1>}, {transform_indices = @transform_11, window_bounds = array<i64: 8, 128>}]} {
    %c0 = arith.constant 0 : index
    %c0_0 = arith.constant 0 : index
    %c0_1 = arith.constant 0 : index
    %0 = vector.load %arg1[%c0, %c0_0, %c0_1] : memref<8x256x4xf32, #tpu.memory_space<vmem>>, vector<8x256x4xf32>
    %cst = arith.constant dense<0.000000e+00> : vector<8x4xf32>
    %1 = vector.multi_reduction <add>, %0, %cst [1] : vector<8x256x4xf32> to vector<8x4xf32>
    %cst_2 = arith.constant 2.560000e+02 : f32
    %2 = vector.broadcast %cst_2 : f32 to vector<8x4xf32>
    %3 = arith.divf %1, %2 : vector<8x4xf32>
    %c0_3 = arith.constant 0 : index
    %c0_4 = arith.constant 0 : index
    %4 = vector.load %arg3[%c0_3, %c0_4] : memref<4x768xf32, #tpu.memory_space<vmem>>, vector<4x768xf32>
    %c0_5 = arith.constant 0 : index
    %c0_6 = arith.constant 0 : index
    %5 = vector.load %arg4[%c0_5, %c0_6] : memref<1x768xf32, #tpu.memory_space<vmem>>, vector<1x768xf32>
    %6 = vector.extract_strided_slice %3 {offsets = [0, 0], sizes = [8, 1], strides = [1, 1]} : vector<8x4xf32> to vector<8x1xf32>
    %7 = vector.extract_strided_slice %4 {offsets = [0, 0], sizes = [1, 768], strides = [1, 1]} : vector<4x768xf32> to vector<1x768xf32>
    %8 = vector.broadcast %6 : vector<8x1xf32> to vector<8x768xf32>
    %9 = vector.broadcast %7 : vector<1x768xf32> to vector<8x768xf32>
    %10 = arith.mulf %8, %9 : vector<8x768xf32>
    %11 = vector.broadcast %5 : vector<1x768xf32> to vector<8x768xf32>
    %12 = arith.addf %11, %10 : vector<8x768xf32>
    %13 = vector.extract_strided_slice %3 {offsets = [0, 1], sizes = [8, 1], strides = [1, 1]} : vector<8x4xf32> to vector<8x1xf32>
    %14 = vector.extract_strided_slice %4 {offsets = [1, 0], sizes = [1, 768], strides = [1, 1]} : vector<4x768xf32> to vector<1x768xf32>
    %15 = vector.broadcast %13 : vector<8x1xf32> to vector<8x768xf32>
    %16 = vector.broadcast %14 : vector<1x768xf32> to vector<8x768xf32>
    %17 = arith.mulf %15, %16 : vector<8x768xf32>
    %18 = arith.addf %12, %17 : vector<8x768xf32>
    %19 = vector.extract_strided_slice %3 {offsets = [0, 2], sizes = [8, 1], strides = [1, 1]} : vector<8x4xf32> to vector<8x1xf32>
    %20 = vector.extract_strided_slice %4 {offsets = [2, 0], sizes = [1, 768], strides = [1, 1]} : vector<4x768xf32> to vector<1x768xf32>
    %21 = vector.broadcast %19 : vector<8x1xf32> to vector<8x768xf32>
    %22 = vector.broadcast %20 : vector<1x768xf32> to vector<8x768xf32>
    %23 = arith.mulf %21, %22 : vector<8x768xf32>
    %24 = arith.addf %18, %23 : vector<8x768xf32>
    %25 = vector.extract_strided_slice %3 {offsets = [0, 3], sizes = [8, 1], strides = [1, 1]} : vector<8x4xf32> to vector<8x1xf32>
    %26 = vector.extract_strided_slice %4 {offsets = [3, 0], sizes = [1, 768], strides = [1, 1]} : vector<4x768xf32> to vector<1x768xf32>
    %27 = vector.broadcast %25 : vector<8x1xf32> to vector<8x768xf32>
    %28 = vector.broadcast %26 : vector<1x768xf32> to vector<8x768xf32>
    %29 = arith.mulf %27, %28 : vector<8x768xf32>
    %30 = arith.addf %24, %29 : vector<8x768xf32>
    %cst_7 = arith.constant dense<0.000000e+00> : vector<8xf32>
    %31 = vector.multi_reduction <add>, %30, %cst_7 [1] : vector<8x768xf32> to vector<8xf32>
    %32 = vector.shape_cast %31 : vector<8xf32> to vector<8x1xf32>
    %cst_8 = arith.constant 7.680000e+02 : f32
    %33 = vector.broadcast %cst_8 : f32 to vector<8x1xf32>
    %34 = arith.divf %32, %33 : vector<8x1xf32>
    %35 = vector.broadcast %34 : vector<8x1xf32> to vector<8x768xf32>
    %36 = arith.subf %30, %35 : vector<8x768xf32>
    %37 = arith.mulf %36, %36 : vector<8x768xf32>
    %cst_9 = arith.constant dense<0.000000e+00> : vector<8xf32>
    %38 = vector.multi_reduction <add>, %37, %cst_9 [1] : vector<8x768xf32> to vector<8xf32>
    %39 = vector.shape_cast %38 : vector<8xf32> to vector<8x1xf32>
    %cst_10 = arith.constant 7.680000e+02 : f32
    %40 = vector.broadcast %cst_10 : f32 to vector<8x1xf32>
    %41 = arith.divf %39, %40 : vector<8x1xf32>
    %42 = vector.broadcast %34 : vector<8x1xf32> to vector<8x768xf32>
    %43 = arith.subf %30, %42 : vector<8x768xf32>
    %cst_11 = arith.constant 9.99999996E-13 : f32
    %44 = vector.broadcast %cst_11 : f32 to vector<8x1xf32>
    %45 = arith.addf %41, %44 : vector<8x1xf32>
    %46 = math.rsqrt %45 : vector<8x1xf32>
    %47 = vector.broadcast %46 : vector<8x1xf32> to vector<8x768xf32>
    %48 = arith.mulf %43, %47 : vector<8x768xf32>
    %c0_12 = arith.constant 0 : index
    %c0_13 = arith.constant 0 : index
    %49 = vector.load %arg5[%c0_12, %c0_13] : memref<1x768xf32, #tpu.memory_space<vmem>>, vector<1x768xf32>
    %50 = vector.broadcast %49 : vector<1x768xf32> to vector<8x768xf32>
    %51 = arith.mulf %48, %50 : vector<8x768xf32>
    %c0_14 = arith.constant 0 : index
    %c0_15 = arith.constant 0 : index
    %52 = vector.load %arg6[%c0_14, %c0_15] : memref<1x768xf32, #tpu.memory_space<vmem>>, vector<1x768xf32>
    %53 = vector.broadcast %52 : vector<1x768xf32> to vector<8x768xf32>
    %54 = arith.addf %51, %53 : vector<8x768xf32>
    %c0_16 = arith.constant 0 : index
    %c0_17 = arith.constant 0 : index
    %55 = vector.load %arg2[%c0_16, %c0_17] : memref<8x2xf32, #tpu.memory_space<vmem>>, vector<8x2xf32>
    %c0_18 = arith.constant 0 : index
    %c0_19 = arith.constant 0 : index
    %56 = vector.load %arg8[%c0_18, %c0_19] : memref<2x64xf32, #tpu.memory_space<vmem>>, vector<2x64xf32>
    %57 = arith.truncf %54 : vector<8x768xf32> to vector<8x768xbf16>
    %c0_20 = arith.constant 0 : index
    %c0_21 = arith.constant 0 : index
    %58 = vector.load %arg7[%c0_20, %c0_21] : memref<768x64xbf16, #tpu.memory_space<vmem>>, vector<768x64xbf16>
    %cst_22 = arith.constant dense<0.000000e+00> : vector<8x64xf32>
    %59 = tpu.matmul %57, %58, %cst_22 {dimension_numbers = #tpu.dot_dimension_numbers<[1], [0], [0], [1], [0, 0, 1, 1], [], []>} : vector<8x768xbf16>, vector<768x64xbf16>, vector<8x64xf32> -> vector<8x64xf32>
    %60 = vector.extract_strided_slice %55 {offsets = [0, 0], sizes = [8, 1], strides = [1, 1]} : vector<8x2xf32> to vector<8x1xf32>
    %61 = vector.extract_strided_slice %56 {offsets = [0, 0], sizes = [1, 64], strides = [1, 1]} : vector<2x64xf32> to vector<1x64xf32>
    %62 = vector.broadcast %60 : vector<8x1xf32> to vector<8x64xf32>
    %63 = vector.broadcast %61 : vector<1x64xf32> to vector<8x64xf32>
    %64 = arith.mulf %62, %63 : vector<8x64xf32>
    %65 = arith.addf %59, %64 : vector<8x64xf32>
    %66 = vector.extract_strided_slice %55 {offsets = [0, 1], sizes = [8, 1], strides = [1, 1]} : vector<8x2xf32> to vector<8x1xf32>
    %67 = vector.extract_strided_slice %56 {offsets = [1, 0], sizes = [1, 64], strides = [1, 1]} : vector<2x64xf32> to vector<1x64xf32>
    %68 = vector.broadcast %66 : vector<8x1xf32> to vector<8x64xf32>
    %69 = vector.broadcast %67 : vector<1x64xf32> to vector<8x64xf32>
    %70 = arith.mulf %68, %69 : vector<8x64xf32>
    %71 = arith.addf %65, %70 : vector<8x64xf32>
    %c0_23 = arith.constant 0 : index
    %c0_24 = arith.constant 0 : index
    %72 = vector.load %arg9[%c0_23, %c0_24] : memref<1x64xf32, #tpu.memory_space<vmem>>, vector<1x64xf32>
    %73 = vector.broadcast %72 : vector<1x64xf32> to vector<8x64xf32>
    %74 = arith.addf %71, %73 : vector<8x64xf32>
    %cst_25 = arith.constant 5.000000e-01 : f32
    %75 = vector.broadcast %cst_25 : f32 to vector<8x64xf32>
    %76 = arith.mulf %75, %74 : vector<8x64xf32>
    %cst_26 = arith.constant 0.707106769 : f32
    %77 = vector.broadcast %cst_26 : f32 to vector<8x64xf32>
    %78 = arith.mulf %74, %77 : vector<8x64xf32>
    %79 = math.erf %78 : vector<8x64xf32>
    %cst_27 = arith.constant 1.000000e+00 : f32
    %80 = vector.broadcast %cst_27 : f32 to vector<8x64xf32>
    %81 = arith.addf %80, %79 : vector<8x64xf32>
    %82 = arith.mulf %76, %81 : vector<8x64xf32>
    %c0_28 = arith.constant 0 : index
    %c0_29 = arith.constant 0 : index
    %83 = vector.load %arg10[%c0_28, %c0_29] : memref<1x64xf32, #tpu.memory_space<vmem>>, vector<1x64xf32>
    %84 = vector.broadcast %83 : vector<1x64xf32> to vector<8x64xf32>
    %85 = arith.mulf %82, %84 : vector<8x64xf32>
    %cst_30 = arith.constant dense<0.000000e+00> : vector<8xf32>
    %86 = vector.multi_reduction <add>, %85, %cst_30 [1] : vector<8x64xf32> to vector<8xf32>
    %87 = vector.shape_cast %86 : vector<8xf32> to vector<8x1xf32>
    %c0_31 = arith.constant 0 : index
    %c0_32 = arith.constant 0 : index
    %88 = vector.load %arg11[%c0_31, %c0_32] : memref<1x1xf32, #tpu.memory_space<vmem>>, vector<1x1xf32>
    %89 = vector.broadcast %88 : vector<1x1xf32> to vector<8x1xf32>
    %90 = arith.addf %87, %89 : vector<8x1xf32>
    %91 = vector.shape_cast %90 : vector<8x1xf32> to vector<8x1xf32>
    %92 = vector.broadcast %91 : vector<8x1xf32> to vector<8x128xf32>
    %c0_33 = arith.constant 0 : index
    %c0_34 = arith.constant 0 : index
    %93 = vector.load %arg12[%c0_33, %c0_34] : memref<8x128xf32, #tpu.memory_space<vmem>>, vector<8x128xf32>
    tpu.vector_store %arg12[%c0_33, %c0_34], %92 {strides = array<i32>} : memref<8x128xf32, #tpu.memory_space<vmem>>, vector<8x128xf32>,
    return
  }
  func.func @transform_0(%arg0: i32) -> (i32, i32, i32) {
    %c0_i32 = arith.constant 0 : i32
    %c0_i32_0 = arith.constant 0 : i32
    %c0_i32_1 = arith.constant 0 : i32
    return %arg0, %c0_i32, %c0_i32_0 : i32, i32, i32
  }
  func.func @transform_1(%arg0: i32) -> (i32, i32) {
    %c0_i32 = arith.constant 0 : i32
    %c0_i32_0 = arith.constant 0 : i32
    return %arg0, %c0_i32 : i32, i32
  }
  func.func @transform_2(%arg0: i32) -> (i32, i32) {
    %c0_i32 = arith.constant 0 : i32
    %c0_i32_0 = arith.constant 0 : i32
    %c0_i32_1 = arith.constant 0 : i32
    return %c0_i32, %c0_i32_0 : i32, i32
  }
  func.func @transform_3(%arg0: i32) -> (i32, i32) {
    %c0_i32 = arith.constant 0 : i32
    %c0_i32_0 = arith.constant 0 : i32
    %c0_i32_1 = arith.constant 0 : i32
    return %c0_i32, %c0_i32_0 : i32, i32
  }
  func.func @transform_4(%arg0: i32) -> (i32, i32) {
    %c0_i32 = arith.constant 0 : i32
    %c0_i32_0 = arith.constant 0 : i32
    %c0_i32_1 = arith.constant 0 : i32
    return %c0_i32, %c0_i32_0 : i32, i32
  }
  func.func @transform_5(%arg0: i32) -> (i32, i32) {
    %c0_i32 = arith.constant 0 : i32
    %c0_i32_0 = arith.constant 0 : i32
    %c0_i32_1 = arith.constant 0 : i32
    return %c0_i32, %c0_i32_0 : i32, i32
  }
  func.func @transform_6(%arg0: i32) -> (i32, i32) {
    %c0_i32 = arith.constant 0 : i32
    %c0_i32_0 = arith.constant 0 : i32
    %c0_i32_1 = arith.constant 0 : i32
    return %c0_i32, %c0_i32_0 : i32, i32
  }
  func.func @transform_7(%arg0: i32) -> (i32, i32) {
    %c0_i32 = arith.constant 0 : i32
    %c0_i32_0 = arith.constant 0 : i32
    %c0_i32_1 = arith.constant 0 : i32
    return %c0_i32, %c0_i32_0 : i32, i32
  }
  func.func @transform_8(%arg0: i32) -> (i32, i32) {
    %c0_i32 = arith.constant 0 : i32
    %c0_i32_0 = arith.constant 0 : i32
    %c0_i32_1 = arith.constant 0 : i32
    return %c0_i32, %c0_i32_0 : i32, i32
  }
  func.func @transform_9(%arg0: i32) -> (i32, i32) {
    %c0_i32 = arith.constant 0 : i32
    %c0_i32_0 = arith.constant 0 : i32
    %c0_i32_1 = arith.constant 0 : i32
    return %c0_i32, %c0_i32_0 : i32, i32
  }
  func.func @transform_10(%arg0: i32) -> (i32, i32) {
    %c0_i32 = arith.constant 0 : i32
    %c0_i32_0 = arith.constant 0 : i32
    %c0_i32_1 = arith.constant 0 : i32
    return %c0_i32, %c0_i32_0 : i32, i32
  }
  func.func @transform_11(%arg0: i32) -> (i32, i32) {
    %c0_i32 = arith.constant 0 : i32
    %c0_i32_0 = arith.constant 0 : i32
    return %arg0, %c0_i32 : i32, i32
  }
}

</mosaic_0001>

<llo_original>
// kernel: net_forward.1
$region0: #{net_forward.1}
  #allocation0 [shape = 'u32[]', space=smem, size = 0x4, offset = 0x4, fixed_abs, tag = 'smem constant byte address 0x4 - core index']
  #allocation1 [shape = 'u32[72,128]{1,0:T(1,128)}', space=vmem, size = 0x9000, scoped, tag = 'internal scratch']
  #allocation2 [shape = 'f32[1,1]{1,0:T(1,128)S(1)}', space=vmem, size = 0x200, scoped, tag = 'scoped memory for net_forward.1']
  %s0 = inlined_call_operand.vmem [shape: f32[8,256,4], index: 0, kind: input, shape index: {}]
  %s1 = inlined_call_operand.vmem [shape: f32[8,2], index: 1, kind: input, shape index: {}]
  %s2 = inlined_call_operand.vmem [shape: f32[4,768], index: 2, kind: input, shape index: {}]
  %s3 = inlined_call_operand.vmem [shape: f32[1,768], index: 3, kind: input, shape index: {}]
  %s4 = inlined_call_operand.vmem [shape: f32[1,768], index: 4, kind: input, shape index: {}]
  %s5 = inlined_call_operand.vmem [shape: f32[1,768], index: 5, kind: input, shape index: {}]
  %s6 = inlined_call_operand.vmem [shape: bf16[768,64], index: 6, kind: input, shape index: {}]
  %s7 = inlined_call_operand.vmem [shape: f32[2,64], index: 7, kind: input, shape index: {}]
  %s8 = inlined_call_operand.vmem [shape: f32[1,64], index: 8, kind: input, shape index: {}]
  %s9 = inlined_call_operand.vmem [shape: f32[1,64], index: 9, kind: input, shape index: {}]
  %s10 = inlined_call_operand.<no memory space> [shape: f32[1,1], index: 10, kind: input, shape index: {}]
  %s11 = inlined_call_operand.vmem [shape: f32[8,128], index: 11, kind: output, shape index: {}]
  %s12 = sld [smem:[#allocation0]]
  $region54: #{net_forward.1} parent=0
    _
  %s14 = ssub.s32 1, %s12
  %s15 = scalar_select 0, %s14, %s12
  %v16 = vstv %s10
  %17 = vst [vmem:[#allocation2] sm:$0x1] %v16
  // Predicated region
  $region2: #{net_forward.1} parent=0 // pred_check
    _
  $region3: #{net_forward.1} parent=0 // pred_check_branch
    %19 = sbr.rel (0) target = $region5
  $region4: #{net_forward.1} parent=0 // pred_region
    _
  $region5: #{net_forward.1} parent=0 // pred_fallthru
    _
  // Predicated region
  $region6: #{net_forward.1} parent=0 // pred_check
    _
  $region7: #{net_forward.1} parent=0 // pred_check_branch
    %21 = sbr.rel (0) target = $region9
  $region8: #{net_forward.1} parent=0 // pred_region
    _
  $region9: #{net_forward.1} parent=0 // pred_fallthru
    _
  // Predicated region
  $region10: #{net_forward.1} parent=0 // pred_check
    _
  $region11: #{net_forward.1} parent=0 // pred_check_branch
    %23 = sbr.rel (0) target = $region13
  $region12: #{net_forward.1} parent=0 // pred_region
    _
  $region13: #{net_forward.1} parent=0 // pred_fallthru
    _
  // Predicated region
  $region14: #{net_forward.1} parent=0 // pred_check
    _
  $region15: #{net_forward.1} parent=0 // pred_check_branch
    %25 = sbr.rel (0) target = $region17
  $region16: #{net_forward.1} parent=0 // pred_region
    _
  $region17: #{net_forward.1} parent=0 // pred_fallthru
    _
  // Predicated region
  $region18: #{net_forward.1} parent=0 // pred_check
    _
  $region19: #{net_forward.1} parent=0 // pred_check_branch
    %27 = sbr.rel (0) target = $region21
  $region20: #{net_forward.1} parent=0 // pred_region
    _
  $region21: #{net_forward.1} parent=0 // pred_fallthru
    _
  // Predicated region
  $region22: #{net_forward.1} parent=0 // pred_check
    _
  $region23: #{net_forward.1} parent=0 // pred_check_branch
    %29 = sbr.rel (0) target = $region25
  $region24: #{net_forward.1} parent=0 // pred_region
    _
  $region25: #{net_forward.1} parent=0 // pred_fallthru
    _
  // Predicated region
  $region26: #{net_forward.1} parent=0 // pred_check
    _
  $region27: #{net_forward.1} parent=0 // pred_check_branch
    %31 = sbr.rel (0) target = $region29
  $region28: #{net_forward.1} parent=0 // pred_region
    _
  $region29: #{net_forward.1} parent=0 // pred_fallthru
    _
  // Predicated region
  $region30: #{net_forward.1} parent=0 // pred_check
    _
  $region31: #{net_forward.1} parent=0 // pred_check_branch
    %33 = sbr.rel (0) target = $region33
  $region32: #{net_forward.1} parent=0 // pred_region
    _
  $region33: #{net_forward.1} parent=0 // pred_fallthru
    _
  // Predicated region
  $region34: #{net_forward.1} parent=0 // pred_check
    _
  $region35: #{net_forward.1} parent=0 // pred_check_branch
    %35 = sbr.rel (0) target = $region37
  $region36: #{net_forward.1} parent=0 // pred_region
    _
  $region37: #{net_forward.1} parent=0 // pred_fallthru
    _
  // Predicated region
  $region38: #{net_forward.1} parent=0 // pred_check
    _
  $region39: #{net_forward.1} parent=0 // pred_check_branch
    %37 = sbr.rel (0) target = $region41
  $region40: #{net_forward.1} parent=0 // pred_region
    _
  $region41: #{net_forward.1} parent=0 // pred_fallthru
    _
  // Predicated region
  $region42: #{net_forward.1} parent=0 // pred_check
    _
  $region43: #{net_forward.1} parent=0 // pred_check_branch
    %39 = sbr.rel (0) target = $region45
  $region44: #{net_forward.1} parent=0 // pred_region
    _
  $region45: #{net_forward.1} parent=0 // pred_fallthru
    _
  %v40 = vld [vmem:[%s0] sm:$0xff]
  %v41 = vld [vmem:[%s0 + $0x8] sm:$0xff]
  %v42 = vld [vmem:[%s0 + $0x10] sm:$0xff]
  %v43 = vld [vmem:[%s0 + $0x18] sm:$0xff]
  %v44 = vld [vmem:[%s0 + $0x20] sm:$0xff]
  %v45 = vld [vmem:[%s0 + $0x28] sm:$0xff]
  %v46 = vld [vmem:[%s0 + $0x30] sm:$0xff]
  %v47 = vld [vmem:[%s0 + $0x38] sm:$0xff]
  %v48 = vld [vmem:[%s0 + $0x40] sm:$0xff]
  %v49 = vld [vmem:[%s0 + $0x48] sm:$0xff]
  %v50 = vld [vmem:[%s0 + $0x50] sm:$0xff]
  %v51 = vld [vmem:[%s0 + $0x58] sm:$0xff]
  %v52 = vld [vmem:[%s0 + $0x60] sm:$0xff]
  %v53 = vld [vmem:[%s0 + $0x68] sm:$0xff]
  %v54 = vld [vmem:[%s0 + $0x70] sm:$0xff]
  %v55 = vld [vmem:[%s0 + $0x78] sm:$0xff]
  %v56 = vld [vmem:[%s0 + $0x80] sm:$0xff]
  %v57 = vld [vmem:[%s0 + $0x88] sm:$0xff]
  %v58 = vld [vmem:[%s0 + $0x90] sm:$0xff]
  %v59 = vld [vmem:[%s0 + $0x98] sm:$0xff]
  %v60 = vld [vmem:[%s0 + $0xa0] sm:$0xff]
  %v61 = vld [vmem:[%s0 + $0xa8] sm:$0xff]
  %v62 = vld [vmem:[%s0 + $0xb0] sm:$0xff]
  %v63 = vld [vmem:[%s0 + $0xb8] sm:$0xff]
  %v64 = vld [vmem:[%s0 + $0xc0] sm:$0xff]
  %v65 = vld [vmem:[%s0 + $0xc8] sm:$0xff]
  %v66 = vld [vmem:[%s0 + $0xd0] sm:$0xff]
  %v67 = vld [vmem:[%s0 + $0xd8] sm:$0xff]
  %v68 = vld [vmem:[%s0 + $0xe0] sm:$0xff]
  %v69 = vld [vmem:[%s0 + $0xe8] sm:$0xff]
  %v70 = vld [vmem:[%s0 + $0xf0] sm:$0xff]
  %v71 = vld [vmem:[%s0 + $0xf8] sm:$0xff]
  %v72 = vld [vmem:[%s0 + $0x100] sm:$0xff]
  %v73 = vld [vmem:[%s0 + $0x108] sm:$0xff]
  %v74 = vld [vmem:[%s0 + $0x110] sm:$0xff]
  %v75 = vld [vmem:[%s0 + $0x118] sm:$0xff]
  %v76 = vld [vmem:[%s0 + $0x120] sm:$0xff]
  %v77 = vld [vmem:[%s0 + $0x128] sm:$0xff]
  %v78 = vld [vmem:[%s0 + $0x130] sm:$0xff]
  %v79 = vld [vmem:[%s0 + $0x138] sm:$0xff]
  %v80 = vld [vmem:[%s0 + $0x140] sm:$0xff]
  %v81 = vld [vmem:[%s0 + $0x148] sm:$0xff]
  %v82 = vld [vmem:[%s0 + $0x150] sm:$0xff]
  %v83 = vld [vmem:[%s0 + $0x158] sm:$0xff]
  %v84 = vld [vmem:[%s0 + $0x160] sm:$0xff]
  %v85 = vld [vmem:[%s0 + $0x168] sm:$0xff]
  %v86 = vld [vmem:[%s0 + $0x170] sm:$0xff]
  %v87 = vld [vmem:[%s0 + $0x178] sm:$0xff]
  %v88 = vld [vmem:[%s0 + $0x180] sm:$0xff]
  %v89 = vld [vmem:[%s0 + $0x188] sm:$0xff]
  %v90 = vld [vmem:[%s0 + $0x190] sm:$0xff]
  %v91 = vld [vmem:[%s0 + $0x198] sm:$0xff]
  %v92 = vld [vmem:[%s0 + $0x1a0] sm:$0xff]
  %v93 = vld [vmem:[%s0 + $0x1a8] sm:$0xff]
  %v94 = vld [vmem:[%s0 + $0x1b0] sm:$0xff]
  %v95 = vld [vmem:[%s0 + $0x1b8] sm:$0xff]
  %v96 = vld [vmem:[%s0 + $0x1c0] sm:$0xff]
  %v97 = vld [vmem:[%s0 + $0x1c8] sm:$0xff]
  %v98 = vld [vmem:[%s0 + $0x1d0] sm:$0xff]
  %v99 = vld [vmem:[%s0 + $0x1d8] sm:$0xff]
  %v100 = vld [vmem:[%s0 + $0x1e0] sm:$0xff]
  %v101 = vld [vmem:[%s0 + $0x1e8] sm:$0xff]
  %v102 = vld [vmem:[%s0 + $0x1f0] sm:$0xff]
  %v103 = vld [vmem:[%s0 + $0x1f8] sm:$0xff]
  %v104 = vld [vmem:[%s0 + $0x200] sm:$0xff]
  %v105 = vld [vmem:[%s0 + $0x208] sm:$0xff]
  %v106 = vld [vmem:[%s0 + $0x210] sm:$0xff]
  %v107 = vld [vmem:[%s0 + $0x218] sm:$0xff]
  %v108 = vld [vmem:[%s0 + $0x220] sm:$0xff]
  %v109 = vld [vmem:[%s0 + $0x228] sm:$0xff]
  %v110 = vld [vmem:[%s0 + $0x230] sm:$0xff]
  %v111 = vld [vmem:[%s0 + $0x238] sm:$0xff]
  %v112 = vld [vmem:[%s0 + $0x240] sm:$0xff]
  %v113 = vld [vmem:[%s0 + $0x248] sm:$0xff]
  %v114 = vld [vmem:[%s0 + $0x250] sm:$0xff]
  %v115 = vld [vmem:[%s0 + $0x258] sm:$0xff]
  %v116 = vld [vmem:[%s0 + $0x260] sm:$0xff]
  %v117 = vld [vmem:[%s0 + $0x268] sm:$0xff]
  %v118 = vld [vmem:[%s0 + $0x270] sm:$0xff]
  %v119 = vld [vmem:[%s0 + $0x278] sm:$0xff]
  %v120 = vld [vmem:[%s0 + $0x280] sm:$0xff]
  %v121 = vld [vmem:[%s0 + $0x288] sm:$0xff]
  %v122 = vld [vmem:[%s0 + $0x290] sm:$0xff]
  %v123 = vld [vmem:[%s0 + $0x298] sm:$0xff]
  %v124 = vld [vmem:[%s0 + $0x2a0] sm:$0xff]
  %v125 = vld [vmem:[%s0 + $0x2a8] sm:$0xff]
  %v126 = vld [vmem:[%s0 + $0x2b0] sm:$0xff]
  %v127 = vld [vmem:[%s0 + $0x2b8] sm:$0xff]
  %v128 = vld [vmem:[%s0 + $0x2c0] sm:$0xff]
  %v129 = vld [vmem:[%s0 + $0x2c8] sm:$0xff]
  %v130 = vld [vmem:[%s0 + $0x2d0] sm:$0xff]
  %v131 = vld [vmem:[%s0 + $0x2d8] sm:$0xff]
  %v132 = vld [vmem:[%s0 + $0x2e0] sm:$0xff]
  %v133 = vld [vmem:[%s0 + $0x2e8] sm:$0xff]
  %v134 = vld [vmem:[%s0 + $0x2f0] sm:$0xff]
  %v135 = vld [vmem:[%s0 + $0x2f8] sm:$0xff]
  %v136 = vld [vmem:[%s0 + $0x300] sm:$0xff]
  %v137 = vld [vmem:[%s0 + $0x308] sm:$0xff]
  %v138 = vld [vmem:[%s0 + $0x310] sm:$0xff]
  %v139 = vld [vmem:[%s0 + $0x318] sm:$0xff]
  %v140 = vld [vmem:[%s0 + $0x320] sm:$0xff]
  %v141 = vld [vmem:[%s0 + $0x328] sm:$0xff]
  %v142 = vld [vmem:[%s0 + $0x330] sm:$0xff]
  %v143 = vld [vmem:[%s0 + $0x338] sm:$0xff]
  %v144 = vld [vmem:[%s0 + $0x340] sm:$0xff]
  %v145 = vld [vmem:[%s0 + $0x348] sm:$0xff]
  %v146 = vld [vmem:[%s0 + $0x350] sm:$0xff]
  %v147 = vld [vmem:[%s0 + $0x358] sm:$0xff]
  %v148 = vld [vmem:[%s0 + $0x360] sm:$0xff]
  %v149 = vld [vmem:[%s0 + $0x368] sm:$0xff]
  %v150 = vld [vmem:[%s0 + $0x370] sm:$0xff]
  %v151 = vld [vmem:[%s0 + $0x378] sm:$0xff]
  %v152 = vld [vmem:[%s0 + $0x380] sm:$0xff]
  %v153 = vld [vmem:[%s0 + $0x388] sm:$0xff]
  %v154 = vld [vmem:[%s0 + $0x390] sm:$0xff]
  %v155 = vld [vmem:[%s0 + $0x398] sm:$0xff]
  %v156 = vld [vmem:[%s0 + $0x3a0] sm:$0xff]
  %v157 = vld [vmem:[%s0 + $0x3a8] sm:$0xff]
  %v158 = vld [vmem:[%s0 + $0x3b0] sm:$0xff]
  %v159 = vld [vmem:[%s0 + $0x3b8] sm:$0xff]
  %v160 = vld [vmem:[%s0 + $0x3c0] sm:$0xff]
  %v161 = vld [vmem:[%s0 + $0x3c8] sm:$0xff]
  %v162 = vld [vmem:[%s0 + $0x3d0] sm:$0xff]
  %v163 = vld [vmem:[%s0 + $0x3d8] sm:$0xff]
  %v164 = vld [vmem:[%s0 + $0x3e0] sm:$0xff]
  %v165 = vld [vmem:[%s0 + $0x3e8] sm:$0xff]
  %v166 = vld [vmem:[%s0 + $0x3f0] sm:$0xff]
  %v167 = vld [vmem:[%s0 + $0x3f8] sm:$0xff]
  %v168 = vld [vmem:[%s0 + $0x400] sm:$0xff]
  %v169 = vld [vmem:[%s0 + $0x408] sm:$0xff]
  %v170 = vld [vmem:[%s0 + $0x410] sm:$0xff]
  %v171 = vld [vmem:[%s0 + $0x418] sm:$0xff]
  %v172 = vld [vmem:[%s0 + $0x420] sm:$0xff]
  %v173 = vld [vmem:[%s0 + $0x428] sm:$0xff]
  %v174 = vld [vmem:[%s0 + $0x430] sm:$0xff]
  %v175 = vld [vmem:[%s0 + $0x438] sm:$0xff]
  %v176 = vld [vmem:[%s0 + $0x440] sm:$0xff]
  %v177 = vld [vmem:[%s0 + $0x448] sm:$0xff]
  %v178 = vld [vmem:[%s0 + $0x450] sm:$0xff]
  %v179 = vld [vmem:[%s0 + $0x458] sm:$0xff]
  %v180 = vld [vmem:[%s0 + $0x460] sm:$0xff]
  %v181 = vld [vmem:[%s0 + $0x468] sm:$0xff]
  %v182 = vld [vmem:[%s0 + $0x470] sm:$0xff]
  %v183 = vld [vmem:[%s0 + $0x478] sm:$0xff]
  %v184 = vld [vmem:[%s0 + $0x480] sm:$0xff]
  %v185 = vld [vmem:[%s0 + $0x488] sm:$0xff]
  %v186 = vld [vmem:[%s0 + $0x490] sm:$0xff]
  %v187 = vld [vmem:[%s0 + $0x498] sm:$0xff]
  %v188 = vld [vmem:[%s0 + $0x4a0] sm:$0xff]
  %v189 = vld [vmem:[%s0 + $0x4a8] sm:$0xff]
  %v190 = vld [vmem:[%s0 + $0x4b0] sm:$0xff]
  %v191 = vld [vmem:[%s0 + $0x4b8] sm:$0xff]
  %v192 = vld [vmem:[%s0 + $0x4c0] sm:$0xff]
  %v193 = vld [vmem:[%s0 + $0x4c8] sm:$0xff]
  %v194 = vld [vmem:[%s0 + $0x4d0] sm:$0xff]
  %v195 = vld [vmem:[%s0 + $0x4d8] sm:$0xff]
  %v196 = vld [vmem:[%s0 + $0x4e0] sm:$0xff]
  %v197 = vld [vmem:[%s0 + $0x4e8] sm:$0xff]
  %v198 = vld [vmem:[%s0 + $0x4f0] sm:$0xff]
  %v199 = vld [vmem:[%s0 + $0x4f8] sm:$0xff]
  %v200 = vld [vmem:[%s0 + $0x500] sm:$0xff]
  %v201 = vld [vmem:[%s0 + $0x508] sm:$0xff]
  %v202 = vld [vmem:[%s0 + $0x510] sm:$0xff]
  %v203 = vld [vmem:[%s0 + $0x518] sm:$0xff]
  %v204 = vld [vmem:[%s0 + $0x520] sm:$0xff]
  %v205 = vld [vmem:[%s0 + $0x528] sm:$0xff]
  %v206 = vld [vmem:[%s0 + $0x530] sm:$0xff]
  %v207 = vld [vmem:[%s0 + $0x538] sm:$0xff]
  %v208 = vld [vmem:[%s0 + $0x540] sm:$0xff]
  %v209 = vld [vmem:[%s0 + $0x548] sm:$0xff]
  %v210 = vld [vmem:[%s0 + $0x550] sm:$0xff]
  %v211 = vld [vmem:[%s0 + $0x558] sm:$0xff]
  %v212 = vld [vmem:[%s0 + $0x560] sm:$0xff]
  %v213 = vld [vmem:[%s0 + $0x568] sm:$0xff]
  %v214 = vld [vmem:[%s0 + $0x570] sm:$0xff]
  %v215 = vld [vmem:[%s0 + $0x578] sm:$0xff]
  %v216 = vld [vmem:[%s0 + $0x580] sm:$0xff]
  %v217 = vld [vmem:[%s0 + $0x588] sm:$0xff]
  %v218 = vld [vmem:[%s0 + $0x590] sm:$0xff]
  %v219 = vld [vmem:[%s0 + $0x598] sm:$0xff]
  %v220 = vld [vmem:[%s0 + $0x5a0] sm:$0xff]
  %v221 = vld [vmem:[%s0 + $0x5a8] sm:$0xff]
  %v222 = vld [vmem:[%s0 + $0x5b0] sm:$0xff]
  %v223 = vld [vmem:[%s0 + $0x5b8] sm:$0xff]
  %v224 = vld [vmem:[%s0 + $0x5c0] sm:$0xff]
  %v225 = vld [vmem:[%s0 + $0x5c8] sm:$0xff]
  %v226 = vld [vmem:[%s0 + $0x5d0] sm:$0xff]
  %v227 = vld [vmem:[%s0 + $0x5d8] sm:$0xff]
  %v228 = vld [vmem:[%s0 + $0x5e0] sm:$0xff]
  %v229 = vld [vmem:[%s0 + $0x5e8] sm:$0xff]
  %v230 = vld [vmem:[%s0 + $0x5f0] sm:$0xff]
  %v231 = vld [vmem:[%s0 + $0x5f8] sm:$0xff]
  %v232 = vld [vmem:[%s0 + $0x600] sm:$0xff]
  %v233 = vld [vmem:[%s0 + $0x608] sm:$0xff]
  %v234 = vld [vmem:[%s0 + $0x610] sm:$0xff]
  %v235 = vld [vmem:[%s0 + $0x618] sm:$0xff]
  %v236 = vld [vmem:[%s0 + $0x620] sm:$0xff]
  %v237 = vld [vmem:[%s0 + $0x628] sm:$0xff]
  %v238 = vld [vmem:[%s0 + $0x630] sm:$0xff]
  %v239 = vld [vmem:[%s0 + $0x638] sm:$0xff]
  %v240 = vld [vmem:[%s0 + $0x640] sm:$0xff]
  %v241 = vld [vmem:[%s0 + $0x648] sm:$0xff]
  %v242 = vld [vmem:[%s0 + $0x650] sm:$0xff]
  %v243 = vld [vmem:[%s0 + $0x658] sm:$0xff]
  %v244 = vld [vmem:[%s0 + $0x660] sm:$0xff]
  %v245 = vld [vmem:[%s0 + $0x668] sm:$0xff]
  %v246 = vld [vmem:[%s0 + $0x670] sm:$0xff]
  %v247 = vld [vmem:[%s0 + $0x678] sm:$0xff]
  %v248 = vld [vmem:[%s0 + $0x680] sm:$0xff]
  %v249 = vld [vmem:[%s0 + $0x688] sm:$0xff]
  %v250 = vld [vmem:[%s0 + $0x690] sm:$0xff]
  %v251 = vld [vmem:[%s0 + $0x698] sm:$0xff]
  %v252 = vld [vmem:[%s0 + $0x6a0] sm:$0xff]
  %v253 = vld [vmem:[%s0 + $0x6a8] sm:$0xff]
  %v254 = vld [vmem:[%s0 + $0x6b0] sm:$0xff]
  %v255 = vld [vmem:[%s0 + $0x6b8] sm:$0xff]
  %v256 = vld [vmem:[%s0 + $0x6c0] sm:$0xff]
  %v257 = vld [vmem:[%s0 + $0x6c8] sm:$0xff]
  %v258 = vld [vmem:[%s0 + $0x6d0] sm:$0xff]
  %v259 = vld [vmem:[%s0 + $0x6d8] sm:$0xff]
  %v260 = vld [vmem:[%s0 + $0x6e0] sm:$0xff]
  %v261 = vld [vmem:[%s0 + $0x6e8] sm:$0xff]
  %v262 = vld [vmem:[%s0 + $0x6f0] sm:$0xff]
  %v263 = vld [vmem:[%s0 + $0x6f8] sm:$0xff]
  %v264 = vld [vmem:[%s0 + $0x700] sm:$0xff]
  %v265 = vld [vmem:[%s0 + $0x708] sm:$0xff]
  %v266 = vld [vmem:[%s0 + $0x710] sm:$0xff]
  %v267 = vld [vmem:[%s0 + $0x718] sm:$0xff]
  %v268 = vld [vmem:[%s0 + $0x720] sm:$0xff]
  %v269 = vld [vmem:[%s0 + $0x728] sm:$0xff]
  %v270 = vld [vmem:[%s0 + $0x730] sm:$0xff]
  %v271 = vld [vmem:[%s0 + $0x738] sm:$0xff]
  %v272 = vld [vmem:[%s0 + $0x740] sm:$0xff]
  %v273 = vld [vmem:[%s0 + $0x748] sm:$0xff]
  %v274 = vld [vmem:[%s0 + $0x750] sm:$0xff]
  %v275 = vld [vmem:[%s0 + $0x758] sm:$0xff]
  %v276 = vld [vmem:[%s0 + $0x760] sm:$0xff]
  %v277 = vld [vmem:[%s0 + $0x768] sm:$0xff]
  %v278 = vld [vmem:[%s0 + $0x770] sm:$0xff]
  %v279 = vld [vmem:[%s0 + $0x778] sm:$0xff]
  %v280 = vld [vmem:[%s0 + $0x780] sm:$0xff]
  %v281 = vld [vmem:[%s0 + $0x788] sm:$0xff]
  %v282 = vld [vmem:[%s0 + $0x790] sm:$0xff]
  %v283 = vld [vmem:[%s0 + $0x798] sm:$0xff]
  %v284 = vld [vmem:[%s0 + $0x7a0] sm:$0xff]
  %v285 = vld [vmem:[%s0 + $0x7a8] sm:$0xff]
  %v286 = vld [vmem:[%s0 + $0x7b0] sm:$0xff]
  %v287 = vld [vmem:[%s0 + $0x7b8] sm:$0xff]
  %v288 = vld [vmem:[%s0 + $0x7c0] sm:$0xff]
  %v289 = vld [vmem:[%s0 + $0x7c8] sm:$0xff]
  %v290 = vld [vmem:[%s0 + $0x7d0] sm:$0xff]
  %v291 = vld [vmem:[%s0 + $0x7d8] sm:$0xff]
  %v292 = vld [vmem:[%s0 + $0x7e0] sm:$0xff]
  %v293 = vld [vmem:[%s0 + $0x7e8] sm:$0xff]
  %v294 = vld [vmem:[%s0 + $0x7f0] sm:$0xff]
  %v295 = vld [vmem:[%s0 + $0x7f8] sm:$0xff]
  %vm296 = vcmask 31744
  %v297 = vsel %vm296, %v40, 0.0
  %v298 = vsel %vm296, %v41, 0.0
  %v299 = vadd.f32 %v297, %v298
  %v300 = vsel %vm296, %v42, 0.0
  %v301 = vadd.f32 %v299, %v300
  %v302 = vsel %vm296, %v43, 0.0
  %v303 = vadd.f32 %v301, %v302
  %v304 = vsel %vm296, %v44, 0.0
  %v305 = vadd.f32 %v303, %v304
  %v306 = vsel %vm296, %v45, 0.0
  %v307 = vadd.f32 %v305, %v306
  %v308 = vsel %vm296, %v46, 0.0
  %v309 = vadd.f32 %v307, %v308
  %v310 = vsel %vm296, %v47, 0.0
  %v311 = vadd.f32 %v309, %v310
  %v312 = vsel %vm296, %v48, 0.0
  %v313 = vadd.f32 %v311, %v312
  %v314 = vsel %vm296, %v49, 0.0
  %v315 = vadd.f32 %v313, %v314
  %v316 = vsel %vm296, %v50, 0.0
  %v317 = vadd.f32 %v315, %v316
  %v318 = vsel %vm296, %v51, 0.0
  %v319 = vadd.f32 %v317, %v318
  %v320 = vsel %vm296, %v52, 0.0
  %v321 = vadd.f32 %v319, %v320
  %v322 = vsel %vm296, %v53, 0.0
  %v323 = vadd.f32 %v321, %v322
  %v324 = vsel %vm296, %v54, 0.0
  %v325 = vadd.f32 %v323, %v324
  %v326 = vsel %vm296, %v55, 0.0
  %v327 = vadd.f32 %v325, %v326
  %v328 = vsel %vm296, %v56, 0.0
  %v329 = vadd.f32 %v327, %v328
  %v330 = vsel %vm296, %v57, 0.0
  %v331 = vadd.f32 %v329, %v330
  %v332 = vsel %vm296, %v58, 0.0
  %v333 = vadd.f32 %v331, %v332
  %v334 = vsel %vm296, %v59, 0.0
  %v335 = vadd.f32 %v333, %v334
  %v336 = vsel %vm296, %v60, 0.0
  %v337 = vadd.f32 %v335, %v336
  %v338 = vsel %vm296, %v61, 0.0
  %v339 = vadd.f32 %v337, %v338
  %v340 = vsel %vm296, %v62, 0.0
  %v341 = vadd.f32 %v339, %v340
  %v342 = vsel %vm296, %v63, 0.0
  %v343 = vadd.f32 %v341, %v342
  %v344 = vsel %vm296, %v64, 0.0
  %v345 = vadd.f32 %v343, %v344
  %v346 = vsel %vm296, %v65, 0.0
  %v347 = vadd.f32 %v345, %v346
  %v348 = vsel %vm296, %v66, 0.0
  %v349 = vadd.f32 %v347, %v348
  %v350 = vsel %vm296, %v67, 0.0
  %v351 = vadd.f32 %v349, %v350
  %v352 = vsel %vm296, %v68, 0.0
  %v353 = vadd.f32 %v351, %v352
  %v354 = vsel %vm296, %v69, 0.0
  %v355 = vadd.f32 %v353, %v354
  %v356 = vsel %vm296, %v70, 0.0
  %v357 = vadd.f32 %v355, %v356
  %v358 = vsel %vm296, %v71, 0.0
  %v359 = vadd.f32 %v357, %v358
  %v360 = vrot.slane %v359, 4
  %v361 = vadd.f32 %v359, %v360
  %v362 = vrot.slane %v361, 2
  %v363 = vadd.f32 %v361, %v362
  %v364 = vrot.slane %v363, 1
  %v365 = vadd.f32 %v363, %v364
  %v366 = vsel %vm296, %v72, 0.0
  %v367 = vsel %vm296, %v73, 0.0
  %v368 = vadd.f32 %v366, %v367
  %v369 = vsel %vm296, %v74, 0.0
  %v370 = vadd.f32 %v368, %v369
  %v371 = vsel %vm296, %v75, 0.0
  %v372 = vadd.f32 %v370, %v371
  %v373 = vsel %vm296, %v76, 0.0
  %v374 = vadd.f32 %v372, %v373
  %v375 = vsel %vm296, %v77, 0.0
  %v376 = vadd.f32 %v374, %v375
  %v377 = vsel %vm296, %v78, 0.0
  %v378 = vadd.f32 %v376, %v377
  %v379 = vsel %vm296, %v79, 0.0
  %v380 = vadd.f32 %v378, %v379
  %v381 = vsel %vm296, %v80, 0.0
  %v382 = vadd.f32 %v380, %v381
  %v383 = vsel %vm296, %v81, 0.0
  %v384 = vadd.f32 %v382, %v383
  %v385 = vsel %vm296, %v82, 0.0
  %v386 = vadd.f32 %v384, %v385
  %v387 = vsel %vm296, %v83, 0.0
  %v388 = vadd.f32 %v386, %v387
  %v389 = vsel %vm296, %v84, 0.0
  %v390 = vadd.f32 %v388, %v389
  %v391 = vsel %vm296, %v85, 0.0
  %v392 = vadd.f32 %v390, %v391
  %v393 = vsel %vm296, %v86, 0.0
  %v394 = vadd.f32 %v392, %v393
  %v395 = vsel %vm296, %v87, 0.0
  %v396 = vadd.f32 %v394, %v395
  %v397 = vsel %vm296, %v88, 0.0
  %v398 = vadd.f32 %v396, %v397
  %v399 = vsel %vm296, %v89, 0.0
  %v400 = vadd.f32 %v398, %v399
  %v401 = vsel %vm296, %v90, 0.0
  %v402 = vadd.f32 %v400, %v401
  %v403 = vsel %vm296, %v91, 0.0
  %v404 = vadd.f32 %v402, %v403
  %v405 = vsel %vm296, %v92, 0.0
  %v406 = vadd.f32 %v404, %v405
  %v407 = vsel %vm296, %v93, 0.0
  %v408 = vadd.f32 %v406, %v407
  %v409 = vsel %vm296, %v94, 0.0
  %v410 = vadd.f32 %v408, %v409
  %v411 = vsel %vm296, %v95, 0.0
  %v412 = vadd.f32 %v410, %v411
  %v413 = vsel %vm296, %v96, 0.0
  %v414 = vadd.f32 %v412, %v413
  %v415 = vsel %vm296, %v97, 0.0
  %v416 = vadd.f32 %v414, %v415
  %v417 = vsel %vm296, %v98, 0.0
  %v418 = vadd.f32 %v416, %v417
  %v419 = vsel %vm296, %v99, 0.0
  %v420 = vadd.f32 %v418, %v419
  %v421 = vsel %vm296, %v100, 0.0
  %v422 = vadd.f32 %v420, %v421
  %v423 = vsel %vm296, %v101, 0.0
  %v424 = vadd.f32 %v422, %v423
  %v425 = vsel %vm296, %v102, 0.0
  %v426 = vadd.f32 %v424, %v425
  %v427 = vsel %vm296, %v103, 0.0
  %v428 = vadd.f32 %v426, %v427
  %v429 = vrot.slane %v428, 4
  %v430 = vadd.f32 %v428, %v429
  %v431 = vrot.slane %v430, 2
  %v432 = vadd.f32 %v430, %v431
  %v433 = vrot.slane %v432, 1
  %v434 = vadd.f32 %v432, %v433
  %v435 = vsel %vm296, %v104, 0.0
  %v436 = vsel %vm296, %v105, 0.0
  %v437 = vadd.f32 %v435, %v436
  %v438 = vsel %vm296, %v106, 0.0
  %v439 = vadd.f32 %v437, %v438
  %v440 = vsel %vm296, %v107, 0.0
  %v441 = vadd.f32 %v439, %v440
  %v442 = vsel %vm296, %v108, 0.0
  %v443 = vadd.f32 %v441, %v442
  %v444 = vsel %vm296, %v109, 0.0
  %v445 = vadd.f32 %v443, %v444
  %v446 = vsel %vm296, %v110, 0.0
  %v447 = vadd.f32 %v445, %v446
  %v448 = vsel %vm296, %v111, 0.0
  %v449 = vadd.f32 %v447, %v448
  %v450 = vsel %vm296, %v112, 0.0
  %v451 = vadd.f32 %v449, %v450
  %v452 = vsel %vm296, %v113, 0.0
  %v453 = vadd.f32 %v451, %v452
  %v454 = vsel %vm296, %v114, 0.0
  %v455 = vadd.f32 %v453, %v454
  %v456 = vsel %vm296, %v115, 0.0
  %v457 = vadd.f32 %v455, %v456
  %v458 = vsel %vm296, %v116, 0.0
  %v459 = vadd.f32 %v457, %v458
  %v460 = vsel %vm296, %v117, 0.0
  %v461 = vadd.f32 %v459, %v460
  %v462 = vsel %vm296, %v118, 0.0
  %v463 = vadd.f32 %v461, %v462
  %v464 = vsel %vm296, %v119, 0.0
  %v465 = vadd.f32 %v463, %v464
  %v466 = vsel %vm296, %v120, 0.0
  %v467 = vadd.f32 %v465, %v466
  %v468 = vsel %vm296, %v121, 0.0
  %v469 = vadd.f32 %v467, %v468
  %v470 = vsel %vm296, %v122, 0.0
  %v471 = vadd.f32 %v469, %v470
  %v472 = vsel %vm296, %v123, 0.0
  %v473 = vadd.f32 %v471, %v472
  %v474 = vsel %vm296, %v124, 0.0
  %v475 = vadd.f32 %v473, %v474
  %v476 = vsel %vm296, %v125, 0.0
  %v477 = vadd.f32 %v475, %v476
  %v478 = vsel %vm296, %v126, 0.0
  %v479 = vadd.f32 %v477, %v478
  %v480 = vsel %vm296, %v127, 0.0
  %v481 = vadd.f32 %v479, %v480
  %v482 = vsel %vm296, %v128, 0.0
  %v483 = vadd.f32 %v481, %v482
  %v484 = vsel %vm296, %v129, 0.0
  %v485 = vadd.f32 %v483, %v484
  %v486 = vsel %vm296, %v130, 0.0
  %v487 = vadd.f32 %v485, %v486
  %v488 = vsel %vm296, %v131, 0.0
  %v489 = vadd.f32 %v487, %v488
  %v490 = vsel %vm296, %v132, 0.0
  %v491 = vadd.f32 %v489, %v490
  %v492 = vsel %vm296, %v133, 0.0
  %v493 = vadd.f32 %v491, %v492
  %v494 = vsel %vm296, %v134, 0.0
  %v495 = vadd.f32 %v493, %v494
  %v496 = vsel %vm296, %v135, 0.0
  %v497 = vadd.f32 %v495, %v496
  %v498 = vrot.slane %v497, 4
  %v499 = vadd.f32 %v497, %v498
  %v500 = vrot.slane %v499, 2
  %v501 = vadd.f32 %v499, %v500
  %v502 = vrot.slane %v501, 1
  %v503 = vadd.f32 %v501, %v502
  %v504 = vsel %vm296, %v136, 0.0
  %v505 = vsel %vm296, %v137, 0.0
  %v506 = vadd.f32 %v504, %v505
  %v507 = vsel %vm296, %v138, 0.0
  %v508 = vadd.f32 %v506, %v507
  %v509 = vsel %vm296, %v139, 0.0
  %v510 = vadd.f32 %v508, %v509
  %v511 = vsel %vm296, %v140, 0.0
  %v512 = vadd.f32 %v510, %v511
  %v513 = vsel %vm296, %v141, 0.0
  %v514 = vadd.f32 %v512, %v513
  %v515 = vsel %vm296, %v142, 0.0
  %v516 = vadd.f32 %v514, %v515
  %v517 = vsel %vm296, %v143, 0.0
  %v518 = vadd.f32 %v516, %v517
  %v519 = vsel %vm296, %v144, 0.0
  %v520 = vadd.f32 %v518, %v519
  %v521 = vsel %vm296, %v145, 0.0
  %v522 = vadd.f32 %v520, %v521
  %v523 = vsel %vm296, %v146, 0.0
  %v524 = vadd.f32 %v522, %v523
  %v525 = vsel %vm296, %v147, 0.0
  %v526 = vadd.f32 %v524, %v525
  %v527 = vsel %vm296, %v148, 0.0
  %v528 = vadd.f32 %v526, %v527
  %v529 = vsel %vm296, %v149, 0.0
  %v530 = vadd.f32 %v528, %v529
  %v531 = vsel %vm296, %v150, 0.0
  %v532 = vadd.f32 %v530, %v531
  %v533 = vsel %vm296, %v151, 0.0
  %v534 = vadd.f32 %v532, %v533
  %v535 = vsel %vm296, %v152, 0.0
  %v536 = vadd.f32 %v534, %v535
  %v537 = vsel %vm296, %v153, 0.0
  %v538 = vadd.f32 %v536, %v537
  %v539 = vsel %vm296, %v154, 0.0
  %v540 = vadd.f32 %v538, %v539
  %v541 = vsel %vm296, %v155, 0.0
  %v542 = vadd.f32 %v540, %v541
  %v543 = vsel %vm296, %v156, 0.0
  %v544 = vadd.f32 %v542, %v543
  %v545 = vsel %vm296, %v157, 0.0
  %v546 = vadd.f32 %v544, %v545
  %v547 = vsel %vm296, %v158, 0.0
  %v548 = vadd.f32 %v546, %v547
  %v549 = vsel %vm296, %v159, 0.0
  %v550 = vadd.f32 %v548, %v549
  %v551 = vsel %vm296, %v160, 0.0
  %v552 = vadd.f32 %v550, %v551
  %v553 = vsel %vm296, %v161, 0.0
  %v554 = vadd.f32 %v552, %v553
  %v555 = vsel %vm296, %v162, 0.0
  %v556 = vadd.f32 %v554, %v555
  %v557 = vsel %vm296, %v163, 0.0
  %v558 = vadd.f32 %v556, %v557
  %v559 = vsel %vm296, %v164, 0.0
  %v560 = vadd.f32 %v558, %v559
  %v561 = vsel %vm296, %v165, 0.0
  %v562 = vadd.f32 %v560, %v561
  %v563 = vsel %vm296, %v166, 0.0
  %v564 = vadd.f32 %v562, %v563
  %v565 = vsel %vm296, %v167, 0.0
  %v566 = vadd.f32 %v564, %v565
  %v567 = vrot.slane %v566, 4
  %v568 = vadd.f32 %v566, %v567
  %v569 = vrot.slane %v568, 2
  %v570 = vadd.f32 %v568, %v569
  %v571 = vrot.slane %v570, 1
  %v572 = vadd.f32 %v570, %v571
  %v573 = vsel %vm296, %v168, 0.0
  %v574 = vsel %vm296, %v169, 0.0
  %v575 = vadd.f32 %v573, %v574
  %v576 = vsel %vm296, %v170, 0.0
  %v577 = vadd.f32 %v575, %v576
  %v578 = vsel %vm296, %v171, 0.0
  %v579 = vadd.f32 %v577, %v578
  %v580 = vsel %vm296, %v172, 0.0
  %v581 = vadd.f32 %v579, %v580
  %v582 = vsel %vm296, %v173, 0.0
  %v583 = vadd.f32 %v581, %v582
  %v584 = vsel %vm296, %v174, 0.0
  %v585 = vadd.f32 %v583, %v584
  %v586 = vsel %vm296, %v175, 0.0
  %v587 = vadd.f32 %v585, %v586
  %v588 = vsel %vm296, %v176, 0.0
  %v589 = vadd.f32 %v587, %v588
  %v590 = vsel %vm296, %v177, 0.0
  %v591 = vadd.f32 %v589, %v590
  %v592 = vsel %vm296, %v178, 0.0
  %v593 = vadd.f32 %v591, %v592
  %v594 = vsel %vm296, %v179, 0.0
  %v595 = vadd.f32 %v593, %v594
  %v596 = vsel %vm296, %v180, 0.0
  %v597 = vadd.f32 %v595, %v596
  %v598 = vsel %vm296, %v181, 0.0
  %v599 = vadd.f32 %v597, %v598
  %v600 = vsel %vm296, %v182, 0.0
  %v601 = vadd.f32 %v599, %v600
  %v602 = vsel %vm296, %v183, 0.0
  %v603 = vadd.f32 %v601, %v602
  %v604 = vsel %vm296, %v184, 0.0
  %v605 = vadd.f32 %v603, %v604
  %v606 = vsel %vm296, %v185, 0.0
  %v607 = vadd.f32 %v605, %v606
  %v608 = vsel %vm296, %v186, 0.0
  %v609 = vadd.f32 %v607, %v608
  %v610 = vsel %vm296, %v187, 0.0
  %v611 = vadd.f32 %v609, %v610
  %v612 = vsel %vm296, %v188, 0.0
  %v613 = vadd.f32 %v611, %v612
  %v614 = vsel %vm296, %v189, 0.0
  %v615 = vadd.f32 %v613, %v614
  %v616 = vsel %vm296, %v190, 0.0
  %v617 = vadd.f32 %v615, %v616
  %v618 = vsel %vm296, %v191, 0.0
  %v619 = vadd.f32 %v617, %v618
  %v620 = vsel %vm296, %v192, 0.0
  %v621 = vadd.f32 %v619, %v620
  %v622 = vsel %vm296, %v193, 0.0
  %v623 = vadd.f32 %v621, %v622
  %v624 = vsel %vm296, %v194, 0.0
  %v625 = vadd.f32 %v623, %v624
  %v626 = vsel %vm296, %v195, 0.0
  %v627 = vadd.f32 %v625, %v626
  %v628 = vsel %vm296, %v196, 0.0
  %v629 = vadd.f32 %v627, %v628
  %v630 = vsel %vm296, %v197, 0.0
  %v631 = vadd.f32 %v629, %v630
  %v632 = vsel %vm296, %v198, 0.0
  %v633 = vadd.f32 %v631, %v632
  %v634 = vsel %vm296, %v199, 0.0
  %v635 = vadd.f32 %v633, %v634
  %v636 = vrot.slane %v635, 4
  %v637 = vadd.f32 %v635, %v636
  %v638 = vrot.slane %v637, 2
  %v639 = vadd.f32 %v637, %v638
  %v640 = vrot.slane %v639, 1
  %v641 = vadd.f32 %v639, %v640
  %v642 = vsel %vm296, %v200, 0.0
  %v643 = vsel %vm296, %v201, 0.0
  %v644 = vadd.f32 %v642, %v643
  %v645 = vsel %vm296, %v202, 0.0
  %v646 = vadd.f32 %v644, %v645
  %v647 = vsel %vm296, %v203, 0.0
  %v648 = vadd.f32 %v646, %v647
  %v649 = vsel %vm296, %v204, 0.0
  %v650 = vadd.f32 %v648, %v649
  %v651 = vsel %vm296, %v205, 0.0
  %v652 = vadd.f32 %v650, %v651
  %v653 = vsel %vm296, %v206, 0.0
  %v654 = vadd.f32 %v652, %v653
  %v655 = vsel %vm296, %v207, 0.0
  %v656 = vadd.f32 %v654, %v655
  %v657 = vsel %vm296, %v208, 0.0
  %v658 = vadd.f32 %v656, %v657
  %v659 = vsel %vm296, %v209, 0.0
  %v660 = vadd.f32 %v658, %v659
  %v661 = vsel %vm296, %v210, 0.0
  %v662 = vadd.f32 %v660, %v661
  %v663 = vsel %vm296, %v211, 0.0
  %v664 = vadd.f32 %v662, %v663
  %v665 = vsel %vm296, %v212, 0.0
  %v666 = vadd.f32 %v664, %v665
  %v667 = vsel %vm296, %v213, 0.0
  %v668 = vadd.f32 %v666, %v667
  %v669 = vsel %vm296, %v214, 0.0
  %v670 = vadd.f32 %v668, %v669
  %v671 = vsel %vm296, %v215, 0.0
  %v672 = vadd.f32 %v670, %v671
  %v673 = vsel %vm296, %v216, 0.0
  %v674 = vadd.f32 %v672, %v673
  %v675 = vsel %vm296, %v217, 0.0
  %v676 = vadd.f32 %v674, %v675
  %v677 = vsel %vm296, %v218, 0.0
  %v678 = vadd.f32 %v676, %v677
  %v679 = vsel %vm296, %v219, 0.0
  %v680 = vadd.f32 %v678, %v679
  %v681 = vsel %vm296, %v220, 0.0
  %v682 = vadd.f32 %v680, %v681
  %v683 = vsel %vm296, %v221, 0.0
  %v684 = vadd.f32 %v682, %v683
  %v685 = vsel %vm296, %v222, 0.0
  %v686 = vadd.f32 %v684, %v685
  %v687 = vsel %vm296, %v223, 0.0
  %v688 = vadd.f32 %v686, %v687
  %v689 = vsel %vm296, %v224, 0.0
  %v690 = vadd.f32 %v688, %v689
  %v691 = vsel %vm296, %v225, 0.0
  %v692 = vadd.f32 %v690, %v691
  %v693 = vsel %vm296, %v226, 0.0
  %v694 = vadd.f32 %v692, %v693
  %v695 = vsel %vm296, %v227, 0.0
  %v696 = vadd.f32 %v694, %v695
  %v697 = vsel %vm296, %v228, 0.0
  %v698 = vadd.f32 %v696, %v697
  %v699 = vsel %vm296, %v229, 0.0
  %v700 = vadd.f32 %v698, %v699
  %v701 = vsel %vm296, %v230, 0.0
  %v702 = vadd.f32 %v700, %v701
  %v703 = vsel %vm296, %v231, 0.0
  %v704 = vadd.f32 %v702, %v703
  %v705 = vrot.slane %v704, 4
  %v706 = vadd.f32 %v704, %v705
  %v707 = vrot.slane %v706, 2
  %v708 = vadd.f32 %v706, %v707
  %v709 = vrot.slane %v708, 1
  %v710 = vadd.f32 %v708, %v709
  %v711 = vsel %vm296, %v232, 0.0
  %v712 = vsel %vm296, %v233, 0.0
  %v713 = vadd.f32 %v711, %v712
  %v714 = vsel %vm296, %v234, 0.0
  %v715 = vadd.f32 %v713, %v714
  %v716 = vsel %vm296, %v235, 0.0
  %v717 = vadd.f32 %v715, %v716
  %v718 = vsel %vm296, %v236, 0.0
  %v719 = vadd.f32 %v717, %v718
  %v720 = vsel %vm296, %v237, 0.0
  %v721 = vadd.f32 %v719, %v720
  %v722 = vsel %vm296, %v238, 0.0
  %v723 = vadd.f32 %v721, %v722
  %v724 = vsel %vm296, %v239, 0.0
  %v725 = vadd.f32 %v723, %v724
  %v726 = vsel %vm296, %v240, 0.0
  %v727 = vadd.f32 %v725, %v726
  %v728 = vsel %vm296, %v241, 0.0
  %v729 = vadd.f32 %v727, %v728
  %v730 = vsel %vm296, %v242, 0.0
  %v731 = vadd.f32 %v729, %v730
  %v732 = vsel %vm296, %v243, 0.0
  %v733 = vadd.f32 %v731, %v732
  %v734 = vsel %vm296, %v244, 0.0
  %v735 = vadd.f32 %v733, %v734
  %v736 = vsel %vm296, %v245, 0.0
  %v737 = vadd.f32 %v735, %v736
  %v738 = vsel %vm296, %v246, 0.0
  %v739 = vadd.f32 %v737, %v738
  %v740 = vsel %vm296, %v247, 0.0
  %v741 = vadd.f32 %v739, %v740
  %v742 = vsel %vm296, %v248, 0.0
  %v743 = vadd.f32 %v741, %v742
  %v744 = vsel %vm296, %v249, 0.0
  %v745 = vadd.f32 %v743, %v744
  %v746 = vsel %vm296, %v250, 0.0
  %v747 = vadd.f32 %v745, %v746
  %v748 = vsel %vm296, %v251, 0.0
  %v749 = vadd.f32 %v747, %v748
  %v750 = vsel %vm296, %v252, 0.0
  %v751 = vadd.f32 %v749, %v750
  %v752 = vsel %vm296, %v253, 0.0
  %v753 = vadd.f32 %v751, %v752
  %v754 = vsel %vm296, %v254, 0.0
  %v755 = vadd.f32 %v753, %v754
  %v756 = vsel %vm296, %v255, 0.0
  %v757 = vadd.f32 %v755, %v756
  %v758 = vsel %vm296, %v256, 0.0
  %v759 = vadd.f32 %v757, %v758
  %v760 = vsel %vm296, %v257, 0.0
  %v761 = vadd.f32 %v759, %v760
  %v762 = vsel %vm296, %v258, 0.0
  %v763 = vadd.f32 %v761, %v762
  %v764 = vsel %vm296, %v259, 0.0
  %v765 = vadd.f32 %v763, %v764
  %v766 = vsel %vm296, %v260, 0.0
  %v767 = vadd.f32 %v765, %v766
  %v768 = vsel %vm296, %v261, 0.0
  %v769 = vadd.f32 %v767, %v768
  %v770 = vsel %vm296, %v262, 0.0
  %v771 = vadd.f32 %v769, %v770
  %v772 = vsel %vm296, %v263, 0.0
  %v773 = vadd.f32 %v771, %v772
  %v774 = vrot.slane %v773, 4
  %v775 = vadd.f32 %v773, %v774
  %v776 = vrot.slane %v775, 2
  %v777 = vadd.f32 %v775, %v776
  %v778 = vrot.slane %v777, 1
  %v779 = vadd.f32 %v777, %v778
  %v780 = vsel %vm296, %v264, 0.0
  %v781 = vsel %vm296, %v265, 0.0
  %v782 = vadd.f32 %v780, %v781
  %v783 = vsel %vm296, %v266, 0.0
  %v784 = vadd.f32 %v782, %v783
  %v785 = vsel %vm296, %v267, 0.0
  %v786 = vadd.f32 %v784, %v785
  %v787 = vsel %vm296, %v268, 0.0
  %v788 = vadd.f32 %v786, %v787
  %v789 = vsel %vm296, %v269, 0.0
  %v790 = vadd.f32 %v788, %v789
  %v791 = vsel %vm296, %v270, 0.0
  %v792 = vadd.f32 %v790, %v791
  %v793 = vsel %vm296, %v271, 0.0
  %v794 = vadd.f32 %v792, %v793
  %v795 = vsel %vm296, %v272, 0.0
  %v796 = vadd.f32 %v794, %v795
  %v797 = vsel %vm296, %v273, 0.0
  %v798 = vadd.f32 %v796, %v797
  %v799 = vsel %vm296, %v274, 0.0
  %v800 = vadd.f32 %v798, %v799
  %v801 = vsel %vm296, %v275, 0.0
  %v802 = vadd.f32 %v800, %v801
  %v803 = vsel %vm296, %v276, 0.0
  %v804 = vadd.f32 %v802, %v803
  %v805 = vsel %vm296, %v277, 0.0
  %v806 = vadd.f32 %v804, %v805
  %v807 = vsel %vm296, %v278, 0.0
  %v808 = vadd.f32 %v806, %v807
  %v809 = vsel %vm296, %v279, 0.0
  %v810 = vadd.f32 %v808, %v809
  %v811 = vsel %vm296, %v280, 0.0
  %v812 = vadd.f32 %v810, %v811
  %v813 = vsel %vm296, %v281, 0.0
  %v814 = vadd.f32 %v812, %v813
  %v815 = vsel %vm296, %v282, 0.0
  %v816 = vadd.f32 %v814, %v815
  %v817 = vsel %vm296, %v283, 0.0
  %v818 = vadd.f32 %v816, %v817
  %v819 = vsel %vm296, %v284, 0.0
  %v820 = vadd.f32 %v818, %v819
  %v821 = vsel %vm296, %v285, 0.0
  %v822 = vadd.f32 %v820, %v821
  %v823 = vsel %vm296, %v286, 0.0
  %v824 = vadd.f32 %v822, %v823
  %v825 = vsel %vm296, %v287, 0.0
  %v826 = vadd.f32 %v824, %v825
  %v827 = vsel %vm296, %v288, 0.0
  %v828 = vadd.f32 %v826, %v827
  %v829 = vsel %vm296, %v289, 0.0
  %v830 = vadd.f32 %v828, %v829
  %v831 = vsel %vm296, %v290, 0.0
  %v832 = vadd.f32 %v830, %v831
  %v833 = vsel %vm296, %v291, 0.0
  %v834 = vadd.f32 %v832, %v833
  %v835 = vsel %vm296, %v292, 0.0
  %v836 = vadd.f32 %v834, %v835
  %v837 = vsel %vm296, %v293, 0.0
  %v838 = vadd.f32 %v836, %v837
  %v839 = vsel %vm296, %v294, 0.0
  %v840 = vadd.f32 %v838, %v839
  %v841 = vsel %vm296, %v295, 0.0
  %v842 = vadd.f32 %v840, %v841
  %v843 = vrot.slane %v842, 4
  %v844 = vadd.f32 %v842, %v843
  %v845 = vrot.slane %v844, 2
  %v846 = vadd.f32 %v844, %v845
  %v847 = vrot.slane %v846, 1
  %v848 = vadd.f32 %v846, %v847
  %v849 = vrcp.pop 256.0
  %v850 = vmul.f32 256.0, %v849
  %v851 = vsub.f32 1.0, %v850
  %v852 = vmul.f32 %v849, %v851
  %v853 = vadd.f32 %v849, %v852
  %vm854 = vweird.f32 %v849
  %v855 = vsel %vm854, %v849, %v853
  %v856 = vmul.f32 %v365, %v855
  %v857 = vmul.f32 %v434, %v855
  %v858 = vmul.f32 %v503, %v855
  %v859 = vmul.f32 %v572, %v855
  %v860 = vmul.f32 %v641, %v855
  %v861 = vmul.f32 %v710, %v855
  %v862 = vmul.f32 %v779, %v855
  %v863 = vmul.f32 %v848, %v855
  %v864 = vld [vmem:[%s2] sm:$0xff]
  %v865 = vld [vmem:[%s2 + $0x8] sm:$0xff]
  %v866 = vld [vmem:[%s2 + $0x10] sm:$0xff]
  %v867 = vld [vmem:[%s3] sm:$0x3f]
  %869 = vset.pattern.permute.xlu0 0
  %870 = vperm.xlu0 %869, %v856
  %v871 = vpop.permute.xlu0 %870
  %874 = vset.pattern.permute.xlu0 0
  %875 = vperm.xlu0 %874, %v857
  %v876 = vpop.permute.xlu0 %875
  %879 = vset.pattern.permute.xlu0 0
  %880 = vperm.xlu0 %879, %v858
  %v881 = vpop.permute.xlu0 %880
  %884 = vset.pattern.permute.xlu0 0
  %885 = vperm.xlu0 %884, %v859
  %v886 = vpop.permute.xlu0 %885
  %889 = vset.pattern.permute.xlu0 0
  %890 = vperm.xlu0 %889, %v860
  %v891 = vpop.permute.xlu0 %890
  %894 = vset.pattern.permute.xlu0 0
  %895 = vperm.xlu0 %894, %v861
  %v896 = vpop.permute.xlu0 %895
  %899 = vset.pattern.permute.xlu0 0
  %900 = vperm.xlu0 %899, %v862
  %v901 = vpop.permute.xlu0 %900
  %904 = vset.pattern.permute.xlu0 0
  %905 = vperm.xlu0 %904, %v863
  %v906 = vpop.permute.xlu0 %905
  %v911 = vperm.slane %v864, 0
  %v912 = vperm.slane %v864, 4
  %v913 = vperm.slane %v865, 0
  %v914 = vperm.slane %v865, 4
  %v915 = vperm.slane %v866, 0
  %v916 = vperm.slane %v866, 4
  %v923 = vperm.slane %v911, 0
  %v924 = vperm.slane %v912, 0
  %v925 = vperm.slane %v913, 0
  %v926 = vperm.slane %v914, 0
  %v927 = vperm.slane %v915, 0
  %v928 = vperm.slane %v916, 0
  %v929 = vmul.f32 %v871, %v923
  %v930 = vmul.f32 %v871, %v924
  %v931 = vmul.f32 %v871, %v925
  %v932 = vmul.f32 %v871, %v926
  %v933 = vmul.f32 %v871, %v927
  %v934 = vmul.f32 %v871, %v928
  %v935 = vmul.f32 %v876, %v923
  %v936 = vmul.f32 %v876, %v924
  %v937 = vmul.f32 %v876, %v925
  %v938 = vmul.f32 %v876, %v926
  %v939 = vmul.f32 %v876, %v927
  %v940 = vmul.f32 %v876, %v928
  %v941 = vmul.f32 %v881, %v923
  %v942 = vmul.f32 %v881, %v924
  %v943 = vmul.f32 %v881, %v925
  %v944 = vmul.f32 %v881, %v926
  %v945 = vmul.f32 %v881, %v927
  %v946 = vmul.f32 %v881, %v928
  %v947 = vmul.f32 %v886, %v923
  %v948 = vmul.f32 %v886, %v924
  %v949 = vmul.f32 %v886, %v925
  %v950 = vmul.f32 %v886, %v926
  %v951 = vmul.f32 %v886, %v927
  %v952 = vmul.f32 %v886, %v928
  %v953 = vmul.f32 %v891, %v923
  %v954 = vmul.f32 %v891, %v924
  %v955 = vmul.f32 %v891, %v925
  %v956 = vmul.f32 %v891, %v926
  %v957 = vmul.f32 %v891, %v927
  %v958 = vmul.f32 %v891, %v928
  %v959 = vmul.f32 %v896, %v923
  %v960 = vmul.f32 %v896, %v924
  %v961 = vmul.f32 %v896, %v925
  %v962 = vmul.f32 %v896, %v926
  %v963 = vmul.f32 %v896, %v927
  %v964 = vmul.f32 %v896, %v928
  %v965 = vmul.f32 %v901, %v923
  %v966 = vmul.f32 %v901, %v924
  %v967 = vmul.f32 %v901, %v925
  %v968 = vmul.f32 %v901, %v926
  %v969 = vmul.f32 %v901, %v927
  %v970 = vmul.f32 %v901, %v928
  %v971 = vmul.f32 %v906, %v923
  %v972 = vmul.f32 %v906, %v924
  %v973 = vmul.f32 %v906, %v925
  %v974 = vmul.f32 %v906, %v926
  %v975 = vmul.f32 %v906, %v927
  %v976 = vmul.f32 %v906, %v928
  %v978 = vperm.slane %v867, 0
  %v979 = vperm.slane %v867, 1
  %v980 = vperm.slane %v867, 2
  %v981 = vperm.slane %v867, 3
  %v982 = vperm.slane %v867, 4
  %v983 = vperm.slane %v867, 5
  %v1038 = vrot.slane %v935, 7
  %vm1039 = vcmask 1041409
  %v1040 = vsel %vm1039, %v1038, %v929
  %v1041 = vrot.slane %v941, 6
  %vm1042 = vcmask 1042434
  %v1043 = vsel %vm1042, %v1041, %v1040
  %v1044 = vrot.slane %v947, 5
  %vm1045 = vcmask 1043459
  %v1046 = vsel %vm1045, %v1044, %v1043
  %v1047 = vrot.slane %v953, 4
  %vm1048 = vcmask 1044484
  %v1049 = vsel %vm1048, %v1047, %v1046
  %v1050 = vrot.slane %v959, 3
  %vm1051 = vcmask 1045509
  %v1052 = vsel %vm1051, %v1050, %v1049
  %v1053 = vrot.slane %v965, 2
  %vm1054 = vcmask 1046534
  %v1055 = vsel %vm1054, %v1053, %v1052
  %v1056 = vrot.slane %v971, 1
  %vm1057 = vcmask 1047559
  %v1058 = vsel %vm1057, %v1056, %v1055
  %v1059 = vrot.slane %v936, 7
  %v1060 = vsel %vm1039, %v1059, %v930
  %v1061 = vrot.slane %v942, 6
  %v1062 = vsel %vm1042, %v1061, %v1060
  %v1063 = vrot.slane %v948, 5
  %v1064 = vsel %vm1045, %v1063, %v1062
  %v1065 = vrot.slane %v954, 4
  %v1066 = vsel %vm1048, %v1065, %v1064
  %v1067 = vrot.slane %v960, 3
  %v1068 = vsel %vm1051, %v1067, %v1066
  %v1069 = vrot.slane %v966, 2
  %v1070 = vsel %vm1054, %v1069, %v1068
  %v1071 = vrot.slane %v972, 1
  %v1072 = vsel %vm1057, %v1071, %v1070
  %v1073 = vrot.slane %v937, 7
  %v1074 = vsel %vm1039, %v1073, %v931
  %v1075 = vrot.slane %v943, 6
  %v1076 = vsel %vm1042, %v1075, %v1074
  %v1077 = vrot.slane %v949, 5
  %v1078 = vsel %vm1045, %v1077, %v1076
  %v1079 = vrot.slane %v955, 4
  %v1080 = vsel %vm1048, %v1079, %v1078
  %v1081 = vrot.slane %v961, 3
  %v1082 = vsel %vm1051, %v1081, %v1080
  %v1083 = vrot.slane %v967, 2
  %v1084 = vsel %vm1054, %v1083, %v1082
  %v1085 = vrot.slane %v973, 1
  %v1086 = vsel %vm1057, %v1085, %v1084
  %v1087 = vrot.slane %v938, 7
  %v1088 = vsel %vm1039, %v1087, %v932
  %v1089 = vrot.slane %v944, 6
  %v1090 = vsel %vm1042, %v1089, %v1088
  %v1091 = vrot.slane %v950, 5
  %v1092 = vsel %vm1045, %v1091, %v1090
  %v1093 = vrot.slane %v956, 4
  %v1094 = vsel %vm1048, %v1093, %v1092
  %v1095 = vrot.slane %v962, 3
  %v1096 = vsel %vm1051, %v1095, %v1094
  %v1097 = vrot.slane %v968, 2
  %v1098 = vsel %vm1054, %v1097, %v1096
  %v1099 = vrot.slane %v974, 1
  %v1100 = vsel %vm1057, %v1099, %v1098
  %v1101 = vrot.slane %v939, 7
  %v1102 = vsel %vm1039, %v1101, %v933
  %v1103 = vrot.slane %v945, 6
  %v1104 = vsel %vm1042, %v1103, %v1102
  %v1105 = vrot.slane %v951, 5
  %v1106 = vsel %vm1045, %v1105, %v1104
  %v1107 = vrot.slane %v957, 4
  %v1108 = vsel %vm1048, %v1107, %v1106
  %v1109 = vrot.slane %v963, 3
  %v1110 = vsel %vm1051, %v1109, %v1108
  %v1111 = vrot.slane %v969, 2
  %v1112 = vsel %vm1054, %v1111, %v1110
  %v1113 = vrot.slane %v975, 1
  %v1114 = vsel %vm1057, %v1113, %v1112
  %v1115 = vrot.slane %v940, 7
  %v1116 = vsel %vm1039, %v1115, %v934
  %v1117 = vrot.slane %v946, 6
  %v1118 = vsel %vm1042, %v1117, %v1116
  %v1119 = vrot.slane %v952, 5
  %v1120 = vsel %vm1045, %v1119, %v1118
  %v1121 = vrot.slane %v958, 4
  %v1122 = vsel %vm1048, %v1121, %v1120
  %v1123 = vrot.slane %v964, 3
  %v1124 = vsel %vm1051, %v1123, %v1122
  %v1125 = vrot.slane %v970, 2
  %v1126 = vsel %vm1054, %v1125, %v1124
  %v1127 = vrot.slane %v976, 1
  %v1128 = vsel %vm1057, %v1127, %v1126
  %v1135 = vadd.f32 %v978, %v1058
  %v1136 = vadd.f32 %v979, %v1072
  %v1137 = vadd.f32 %v980, %v1086
  %v1138 = vadd.f32 %v981, %v1100
  %v1139 = vadd.f32 %v982, %v1114
  %v1140 = vadd.f32 %v983, %v1128
  %1141 = vset.pattern.permute.xlu0 1
  %1142 = vperm.xlu0 %1141, %v856
  %v1143 = vpop.permute.xlu0 %1142
  %1145 = vset.pattern.permute.xlu0 1
  %1146 = vperm.xlu0 %1145, %v857
  %v1147 = vpop.permute.xlu0 %1146
  %1149 = vset.pattern.permute.xlu0 1
  %1150 = vperm.xlu0 %1149, %v858
  %v1151 = vpop.permute.xlu0 %1150
  %1153 = vset.pattern.permute.xlu0 1
  %1154 = vperm.xlu0 %1153, %v859
  %v1155 = vpop.permute.xlu0 %1154
  %1157 = vset.pattern.permute.xlu0 1
  %1158 = vperm.xlu0 %1157, %v860
  %v1159 = vpop.permute.xlu0 %1158
  %1161 = vset.pattern.permute.xlu0 1
  %1162 = vperm.xlu0 %1161, %v861
  %v1163 = vpop.permute.xlu0 %1162
  %1165 = vset.pattern.permute.xlu0 1
  %1166 = vperm.xlu0 %1165, %v862
  %v1167 = vpop.permute.xlu0 %1166
  %1169 = vset.pattern.permute.xlu0 1
  %1170 = vperm.xlu0 %1169, %v863
  %v1171 = vpop.permute.xlu0 %1170
  %v1173 = vperm.slane %v864, 1
  %v1174 = vperm.slane %v864, 5
  %v1175 = vperm.slane %v865, 1
  %v1176 = vperm.slane %v865, 5
  %v1177 = vperm.slane %v866, 1
  %v1178 = vperm.slane %v866, 5
  %v1185 = vperm.slane %v1173, 1
  %v1186 = vperm.slane %v1174, 1
  %v1187 = vperm.slane %v1175, 1
  %v1188 = vperm.slane %v1176, 1
  %v1189 = vperm.slane %v1177, 1
  %v1190 = vperm.slane %v1178, 1
  %v1191 = vmul.f32 %v1143, %v1185
  %v1192 = vmul.f32 %v1143, %v1186
  %v1193 = vmul.f32 %v1143, %v1187
  %v1194 = vmul.f32 %v1143, %v1188
  %v1195 = vmul.f32 %v1143, %v1189
  %v1196 = vmul.f32 %v1143, %v1190
  %v1197 = vmul.f32 %v1147, %v1185
  %v1198 = vmul.f32 %v1147, %v1186
  %v1199 = vmul.f32 %v1147, %v1187
  %v1200 = vmul.f32 %v1147, %v1188
  %v1201 = vmul.f32 %v1147, %v1189
  %v1202 = vmul.f32 %v1147, %v1190
  %v1203 = vmul.f32 %v1151, %v1185
  %v1204 = vmul.f32 %v1151, %v1186
  %v1205 = vmul.f32 %v1151, %v1187
  %v1206 = vmul.f32 %v1151, %v1188
  %v1207 = vmul.f32 %v1151, %v1189
  %v1208 = vmul.f32 %v1151, %v1190
  %v1209 = vmul.f32 %v1155, %v1185
  %v1210 = vmul.f32 %v1155, %v1186
  %v1211 = vmul.f32 %v1155, %v1187
  %v1212 = vmul.f32 %v1155, %v1188
  %v1213 = vmul.f32 %v1155, %v1189
  %v1214 = vmul.f32 %v1155, %v1190
  %v1215 = vmul.f32 %v1159, %v1185
  %v1216 = vmul.f32 %v1159, %v1186
  %v1217 = vmul.f32 %v1159, %v1187
  %v1218 = vmul.f32 %v1159, %v1188
  %v1219 = vmul.f32 %v1159, %v1189
  %v1220 = vmul.f32 %v1159, %v1190
  %v1221 = vmul.f32 %v1163, %v1185
  %v1222 = vmul.f32 %v1163, %v1186
  %v1223 = vmul.f32 %v1163, %v1187
  %v1224 = vmul.f32 %v1163, %v1188
  %v1225 = vmul.f32 %v1163, %v1189
  %v1226 = vmul.f32 %v1163, %v1190
  %v1227 = vmul.f32 %v1167, %v1185
  %v1228 = vmul.f32 %v1167, %v1186
  %v1229 = vmul.f32 %v1167, %v1187
  %v1230 = vmul.f32 %v1167, %v1188
  %v1231 = vmul.f32 %v1167, %v1189
  %v1232 = vmul.f32 %v1167, %v1190
  %v1233 = vmul.f32 %v1171, %v1185
  %v1234 = vmul.f32 %v1171, %v1186
  %v1235 = vmul.f32 %v1171, %v1187
  %v1236 = vmul.f32 %v1171, %v1188
  %v1237 = vmul.f32 %v1171, %v1189
  %v1238 = vmul.f32 %v1171, %v1190
  %v1287 = vrot.slane %v1197, 7
  %v1288 = vsel %vm1039, %v1287, %v1191
  %v1289 = vrot.slane %v1203, 6
  %v1290 = vsel %vm1042, %v1289, %v1288
  %v1291 = vrot.slane %v1209, 5
  %v1292 = vsel %vm1045, %v1291, %v1290
  %v1293 = vrot.slane %v1215, 4
  %v1294 = vsel %vm1048, %v1293, %v1292
  %v1295 = vrot.slane %v1221, 3
  %v1296 = vsel %vm1051, %v1295, %v1294
  %v1297 = vrot.slane %v1227, 2
  %v1298 = vsel %vm1054, %v1297, %v1296
  %v1299 = vrot.slane %v1233, 1
  %v1300 = vsel %vm1057, %v1299, %v1298
  %v1301 = vrot.slane %v1198, 7
  %v1302 = vsel %vm1039, %v1301, %v1192
  %v1303 = vrot.slane %v1204, 6
  %v1304 = vsel %vm1042, %v1303, %v1302
  %v1305 = vrot.slane %v1210, 5
  %v1306 = vsel %vm1045, %v1305, %v1304
  %v1307 = vrot.slane %v1216, 4
  %v1308 = vsel %vm1048, %v1307, %v1306
  %v1309 = vrot.slane %v1222, 3
  %v1310 = vsel %vm1051, %v1309, %v1308
  %v1311 = vrot.slane %v1228, 2
  %v1312 = vsel %vm1054, %v1311, %v1310
  %v1313 = vrot.slane %v1234, 1
  %v1314 = vsel %vm1057, %v1313, %v1312
  %v1315 = vrot.slane %v1199, 7
  %v1316 = vsel %vm1039, %v1315, %v1193
  %v1317 = vrot.slane %v1205, 6
  %v1318 = vsel %vm1042, %v1317, %v1316
  %v1319 = vrot.slane %v1211, 5
  %v1320 = vsel %vm1045, %v1319, %v1318
  %v1321 = vrot.slane %v1217, 4
  %v1322 = vsel %vm1048, %v1321, %v1320
  %v1323 = vrot.slane %v1223, 3
  %v1324 = vsel %vm1051, %v1323, %v1322
  %v1325 = vrot.slane %v1229, 2
  %v1326 = vsel %vm1054, %v1325, %v1324
  %v1327 = vrot.slane %v1235, 1
  %v1328 = vsel %vm1057, %v1327, %v1326
  %v1329 = vrot.slane %v1200, 7
  %v1330 = vsel %vm1039, %v1329, %v1194
  %v1331 = vrot.slane %v1206, 6
  %v1332 = vsel %vm1042, %v1331, %v1330
  %v1333 = vrot.slane %v1212, 5
  %v1334 = vsel %vm1045, %v1333, %v1332
  %v1335 = vrot.slane %v1218, 4
  %v1336 = vsel %vm1048, %v1335, %v1334
  %v1337 = vrot.slane %v1224, 3
  %v1338 = vsel %vm1051, %v1337, %v1336
  %v1339 = vrot.slane %v1230, 2
  %v1340 = vsel %vm1054, %v1339, %v1338
  %v1341 = vrot.slane %v1236, 1
  %v1342 = vsel %vm1057, %v1341, %v1340
  %v1343 = vrot.slane %v1201, 7
  %v1344 = vsel %vm1039, %v1343, %v1195
  %v1345 = vrot.slane %v1207, 6
  %v1346 = vsel %vm1042, %v1345, %v1344
  %v1347 = vrot.slane %v1213, 5
  %v1348 = vsel %vm1045, %v1347, %v1346
  %v1349 = vrot.slane %v1219, 4
  %v1350 = vsel %vm1048, %v1349, %v1348
  %v1351 = vrot.slane %v1225, 3
  %v1352 = vsel %vm1051, %v1351, %v1350
  %v1353 = vrot.slane %v1231, 2
  %v1354 = vsel %vm1054, %v1353, %v1352
  %v1355 = vrot.slane %v1237, 1
  %v1356 = vsel %vm1057, %v1355, %v1354
  %v1357 = vrot.slane %v1202, 7
  %v1358 = vsel %vm1039, %v1357, %v1196
  %v1359 = vrot.slane %v1208, 6
  %v1360 = vsel %vm1042, %v1359, %v1358
  %v1361 = vrot.slane %v1214, 5
  %v1362 = vsel %vm1045, %v1361, %v1360
  %v1363 = vrot.slane %v1220, 4
  %v1364 = vsel %vm1048, %v1363, %v1362
  %v1365 = vrot.slane %v1226, 3
  %v1366 = vsel %vm1051, %v1365, %v1364
  %v1367 = vrot.slane %v1232, 2
  %v1368 = vsel %vm1054, %v1367, %v1366
  %v1369 = vrot.slane %v1238, 1
  %v1370 = vsel %vm1057, %v1369, %v1368
  %v1377 = vadd.f32 %v1135, %v1300
  %v1378 = vadd.f32 %v1136, %v1314
  %v1379 = vadd.f32 %v1137, %v1328
  %v1380 = vadd.f32 %v1138, %v1342
  %v1381 = vadd.f32 %v1139, %v1356
  %v1382 = vadd.f32 %v1140, %v1370
  %1383 = vset.pattern.permute.xlu0 2
  %1384 = vperm.xlu0 %1383, %v856
  %v1385 = vpop.permute.xlu0 %1384
  %1387 = vset.pattern.permute.xlu0 2
  %1388 = vperm.xlu0 %1387, %v857
  %v1389 = vpop.permute.xlu0 %1388
  %1391 = vset.pattern.permute.xlu0 2
  %1392 = vperm.xlu0 %1391, %v858
  %v1393 = vpop.permute.xlu0 %1392
  %1395 = vset.pattern.permute.xlu0 2
  %1396 = vperm.xlu0 %1395, %v859
  %v1397 = vpop.permute.xlu0 %1396
  %1399 = vset.pattern.permute.xlu0 2
  %1400 = vperm.xlu0 %1399, %v860
  %v1401 = vpop.permute.xlu0 %1400
  %1403 = vset.pattern.permute.xlu0 2
  %1404 = vperm.xlu0 %1403, %v861
  %v1405 = vpop.permute.xlu0 %1404
  %1407 = vset.pattern.permute.xlu0 2
  %1408 = vperm.xlu0 %1407, %v862
  %v1409 = vpop.permute.xlu0 %1408
  %1411 = vset.pattern.permute.xlu0 2
  %1412 = vperm.xlu0 %1411, %v863
  %v1413 = vpop.permute.xlu0 %1412
  %v1415 = vperm.slane %v864, 2
  %v1416 = vperm.slane %v864, 6
  %v1417 = vperm.slane %v865, 2
  %v1418 = vperm.slane %v865, 6
  %v1419 = vperm.slane %v866, 2
  %v1420 = vperm.slane %v866, 6
  %v1427 = vperm.slane %v1415, 2
  %v1428 = vperm.slane %v1416, 2
  %v1429 = vperm.slane %v1417, 2
  %v1430 = vperm.slane %v1418, 2
  %v1431 = vperm.slane %v1419, 2
  %v1432 = vperm.slane %v1420, 2
  %v1433 = vmul.f32 %v1385, %v1427
  %v1434 = vmul.f32 %v1385, %v1428
  %v1435 = vmul.f32 %v1385, %v1429
  %v1436 = vmul.f32 %v1385, %v1430
  %v1437 = vmul.f32 %v1385, %v1431
  %v1438 = vmul.f32 %v1385, %v1432
  %v1439 = vmul.f32 %v1389, %v1427
  %v1440 = vmul.f32 %v1389, %v1428
  %v1441 = vmul.f32 %v1389, %v1429
  %v1442 = vmul.f32 %v1389, %v1430
  %v1443 = vmul.f32 %v1389, %v1431
  %v1444 = vmul.f32 %v1389, %v1432
  %v1445 = vmul.f32 %v1393, %v1427
  %v1446 = vmul.f32 %v1393, %v1428
  %v1447 = vmul.f32 %v1393, %v1429
  %v1448 = vmul.f32 %v1393, %v1430
  %v1449 = vmul.f32 %v1393, %v1431
  %v1450 = vmul.f32 %v1393, %v1432
  %v1451 = vmul.f32 %v1397, %v1427
  %v1452 = vmul.f32 %v1397, %v1428
  %v1453 = vmul.f32 %v1397, %v1429
  %v1454 = vmul.f32 %v1397, %v1430
  %v1455 = vmul.f32 %v1397, %v1431
  %v1456 = vmul.f32 %v1397, %v1432
  %v1457 = vmul.f32 %v1401, %v1427
  %v1458 = vmul.f32 %v1401, %v1428
  %v1459 = vmul.f32 %v1401, %v1429
  %v1460 = vmul.f32 %v1401, %v1430
  %v1461 = vmul.f32 %v1401, %v1431
  %v1462 = vmul.f32 %v1401, %v1432
  %v1463 = vmul.f32 %v1405, %v1427
  %v1464 = vmul.f32 %v1405, %v1428
  %v1465 = vmul.f32 %v1405, %v1429
  %v1466 = vmul.f32 %v1405, %v1430
  %v1467 = vmul.f32 %v1405, %v1431
  %v1468 = vmul.f32 %v1405, %v1432
  %v1469 = vmul.f32 %v1409, %v1427
  %v1470 = vmul.f32 %v1409, %v1428
  %v1471 = vmul.f32 %v1409, %v1429
  %v1472 = vmul.f32 %v1409, %v1430
  %v1473 = vmul.f32 %v1409, %v1431
  %v1474 = vmul.f32 %v1409, %v1432
  %v1475 = vmul.f32 %v1413, %v1427
  %v1476 = vmul.f32 %v1413, %v1428
  %v1477 = vmul.f32 %v1413, %v1429
  %v1478 = vmul.f32 %v1413, %v1430
  %v1479 = vmul.f32 %v1413, %v1431
  %v1480 = vmul.f32 %v1413, %v1432
  %v1529 = vrot.slane %v1439, 7
  %v1530 = vsel %vm1039, %v1529, %v1433
  %v1531 = vrot.slane %v1445, 6
  %v1532 = vsel %vm1042, %v1531, %v1530
  %v1533 = vrot.slane %v1451, 5
  %v1534 = vsel %vm1045, %v1533, %v1532
  %v1535 = vrot.slane %v1457, 4
  %v1536 = vsel %vm1048, %v1535, %v1534
  %v1537 = vrot.slane %v1463, 3
  %v1538 = vsel %vm1051, %v1537, %v1536
  %v1539 = vrot.slane %v1469, 2
  %v1540 = vsel %vm1054, %v1539, %v1538
  %v1541 = vrot.slane %v1475, 1
  %v1542 = vsel %vm1057, %v1541, %v1540
  %v1543 = vrot.slane %v1440, 7
  %v1544 = vsel %vm1039, %v1543, %v1434
  %v1545 = vrot.slane %v1446, 6
  %v1546 = vsel %vm1042, %v1545, %v1544
  %v1547 = vrot.slane %v1452, 5
  %v1548 = vsel %vm1045, %v1547, %v1546
  %v1549 = vrot.slane %v1458, 4
  %v1550 = vsel %vm1048, %v1549, %v1548
  %v1551 = vrot.slane %v1464, 3
  %v1552 = vsel %vm1051, %v1551, %v1550
  %v1553 = vrot.slane %v1470, 2
  %v1554 = vsel %vm1054, %v1553, %v1552
  %v1555 = vrot.slane %v1476, 1
  %v1556 = vsel %vm1057, %v1555, %v1554
  %v1557 = vrot.slane %v1441, 7
  %v1558 = vsel %vm1039, %v1557, %v1435
  %v1559 = vrot.slane %v1447, 6
  %v1560 = vsel %vm1042, %v1559, %v1558
  %v1561 = vrot.slane %v1453, 5
  %v1562 = vsel %vm1045, %v1561, %v1560
  %v1563 = vrot.slane %v1459, 4
  %v1564 = vsel %vm1048, %v1563, %v1562
  %v1565 = vrot.slane %v1465, 3
  %v1566 = vsel %vm1051, %v1565, %v1564
  %v1567 = vrot.slane %v1471, 2
  %v1568 = vsel %vm1054, %v1567, %v1566
  %v1569 = vrot.slane %v1477, 1
  %v1570 = vsel %vm1057, %v1569, %v1568
  %v1571 = vrot.slane %v1442, 7
  %v1572 = vsel %vm1039, %v1571, %v1436
  %v1573 = vrot.slane %v1448, 6
  %v1574 = vsel %vm1042, %v1573, %v1572
  %v1575 = vrot.slane %v1454, 5
  %v1576 = vsel %vm1045, %v1575, %v1574
  %v1577 = vrot.slane %v1460, 4
  %v1578 = vsel %vm1048, %v1577, %v1576
  %v1579 = vrot.slane %v1466, 3
  %v1580 = vsel %vm1051, %v1579, %v1578
  %v1581 = vrot.slane %v1472, 2
  %v1582 = vsel %vm1054, %v1581, %v1580
  %v1583 = vrot.slane %v1478, 1
  %v1584 = vsel %vm1057, %v1583, %v1582
  %v1585 = vrot.slane %v1443, 7
  %v1586 = vsel %vm1039, %v1585, %v1437
  %v1587 = vrot.slane %v1449, 6
  %v1588 = vsel %vm1042, %v1587, %v1586
  %v1589 = vrot.slane %v1455, 5
  %v1590 = vsel %vm1045, %v1589, %v1588
  %v1591 = vrot.slane %v1461, 4
  %v1592 = vsel %vm1048, %v1591, %v1590
  %v1593 = vrot.slane %v1467, 3
  %v1594 = vsel %vm1051, %v1593, %v1592
  %v1595 = vrot.slane %v1473, 2
  %v1596 = vsel %vm1054, %v1595, %v1594
  %v1597 = vrot.slane %v1479, 1
  %v1598 = vsel %vm1057, %v1597, %v1596
  %v1599 = vrot.slane %v1444, 7
  %v1600 = vsel %vm1039, %v1599, %v1438
  %v1601 = vrot.slane %v1450, 6
  %v1602 = vsel %vm1042, %v1601, %v1600
  %v1603 = vrot.slane %v1456, 5
  %v1604 = vsel %vm1045, %v1603, %v1602
  %v1605 = vrot.slane %v1462, 4
  %v1606 = vsel %vm1048, %v1605, %v1604
  %v1607 = vrot.slane %v1468, 3
  %v1608 = vsel %vm1051, %v1607, %v1606
  %v1609 = vrot.slane %v1474, 2
  %v1610 = vsel %vm1054, %v1609, %v1608
  %v1611 = vrot.slane %v1480, 1
  %v1612 = vsel %vm1057, %v1611, %v1610
  %v1619 = vadd.f32 %v1377, %v1542
  %v1620 = vadd.f32 %v1378, %v1556
  %v1621 = vadd.f32 %v1379, %v1570
  %v1622 = vadd.f32 %v1380, %v1584
  %v1623 = vadd.f32 %v1381, %v1598
  %v1624 = vadd.f32 %v1382, %v1612
  %1625 = vset.pattern.permute.xlu0 3
  %1626 = vperm.xlu0 %1625, %v856
  %v1627 = vpop.permute.xlu0 %1626
  %1629 = vset.pattern.permute.xlu0 3
  %1630 = vperm.xlu0 %1629, %v857
  %v1631 = vpop.permute.xlu0 %1630
  %1633 = vset.pattern.permute.xlu0 3
  %1634 = vperm.xlu0 %1633, %v858
  %v1635 = vpop.permute.xlu0 %1634
  %1637 = vset.pattern.permute.xlu0 3
  %1638 = vperm.xlu0 %1637, %v859
  %v1639 = vpop.permute.xlu0 %1638
  %1641 = vset.pattern.permute.xlu0 3
  %1642 = vperm.xlu0 %1641, %v860
  %v1643 = vpop.permute.xlu0 %1642
  %1645 = vset.pattern.permute.xlu0 3
  %1646 = vperm.xlu0 %1645, %v861
  %v1647 = vpop.permute.xlu0 %1646
  %1649 = vset.pattern.permute.xlu0 3
  %1650 = vperm.xlu0 %1649, %v862
  %v1651 = vpop.permute.xlu0 %1650
  %1653 = vset.pattern.permute.xlu0 3
  %1654 = vperm.xlu0 %1653, %v863
  %v1655 = vpop.permute.xlu0 %1654
  %v1657 = vperm.slane %v864, 3
  %v1658 = vperm.slane %v864, 7
  %v1659 = vperm.slane %v865, 3
  %v1660 = vperm.slane %v865, 7
  %v1661 = vperm.slane %v866, 3
  %v1662 = vperm.slane %v866, 7
  %v1669 = vperm.slane %v1657, 3
  %v1670 = vperm.slane %v1658, 3
  %v1671 = vperm.slane %v1659, 3
  %v1672 = vperm.slane %v1660, 3
  %v1673 = vperm.slane %v1661, 3
  %v1674 = vperm.slane %v1662, 3
  %v1675 = vmul.f32 %v1627, %v1669
  %v1676 = vmul.f32 %v1627, %v1670
  %v1677 = vmul.f32 %v1627, %v1671
  %v1678 = vmul.f32 %v1627, %v1672
  %v1679 = vmul.f32 %v1627, %v1673
  %v1680 = vmul.f32 %v1627, %v1674
  %v1681 = vmul.f32 %v1631, %v1669
  %v1682 = vmul.f32 %v1631, %v1670
  %v1683 = vmul.f32 %v1631, %v1671
  %v1684 = vmul.f32 %v1631, %v1672
  %v1685 = vmul.f32 %v1631, %v1673
  %v1686 = vmul.f32 %v1631, %v1674
  %v1687 = vmul.f32 %v1635, %v1669
  %v1688 = vmul.f32 %v1635, %v1670
  %v1689 = vmul.f32 %v1635, %v1671
  %v1690 = vmul.f32 %v1635, %v1672
  %v1691 = vmul.f32 %v1635, %v1673
  %v1692 = vmul.f32 %v1635, %v1674
  %v1693 = vmul.f32 %v1639, %v1669
  %v1694 = vmul.f32 %v1639, %v1670
  %v1695 = vmul.f32 %v1639, %v1671
  %v1696 = vmul.f32 %v1639, %v1672
  %v1697 = vmul.f32 %v1639, %v1673
  %v1698 = vmul.f32 %v1639, %v1674
  %v1699 = vmul.f32 %v1643, %v1669
  %v1700 = vmul.f32 %v1643, %v1670
  %v1701 = vmul.f32 %v1643, %v1671
  %v1702 = vmul.f32 %v1643, %v1672
  %v1703 = vmul.f32 %v1643, %v1673
  %v1704 = vmul.f32 %v1643, %v1674
  %v1705 = vmul.f32 %v1647, %v1669
  %v1706 = vmul.f32 %v1647, %v1670
  %v1707 = vmul.f32 %v1647, %v1671
  %v1708 = vmul.f32 %v1647, %v1672
  %v1709 = vmul.f32 %v1647, %v1673
  %v1710 = vmul.f32 %v1647, %v1674
  %v1711 = vmul.f32 %v1651, %v1669
  %v1712 = vmul.f32 %v1651, %v1670
  %v1713 = vmul.f32 %v1651, %v1671
  %v1714 = vmul.f32 %v1651, %v1672
  %v1715 = vmul.f32 %v1651, %v1673
  %v1716 = vmul.f32 %v1651, %v1674
  %v1717 = vmul.f32 %v1655, %v1669
  %v1718 = vmul.f32 %v1655, %v1670
  %v1719 = vmul.f32 %v1655, %v1671
  %v1720 = vmul.f32 %v1655, %v1672
  %v1721 = vmul.f32 %v1655, %v1673
  %v1722 = vmul.f32 %v1655, %v1674
  %v1771 = vrot.slane %v1681, 7
  %v1772 = vsel %vm1039, %v1771, %v1675
  %v1773 = vrot.slane %v1687, 6
  %v1774 = vsel %vm1042, %v1773, %v1772
  %v1775 = vrot.slane %v1693, 5
  %v1776 = vsel %vm1045, %v1775, %v1774
  %v1777 = vrot.slane %v1699, 4
  %v1778 = vsel %vm1048, %v1777, %v1776
  %v1779 = vrot.slane %v1705, 3
  %v1780 = vsel %vm1051, %v1779, %v1778
  %v1781 = vrot.slane %v1711, 2
  %v1782 = vsel %vm1054, %v1781, %v1780
  %v1783 = vrot.slane %v1717, 1
  %v1784 = vsel %vm1057, %v1783, %v1782
  %v1785 = vrot.slane %v1682, 7
  %v1786 = vsel %vm1039, %v1785, %v1676
  %v1787 = vrot.slane %v1688, 6
  %v1788 = vsel %vm1042, %v1787, %v1786
  %v1789 = vrot.slane %v1694, 5
  %v1790 = vsel %vm1045, %v1789, %v1788
  %v1791 = vrot.slane %v1700, 4
  %v1792 = vsel %vm1048, %v1791, %v1790
  %v1793 = vrot.slane %v1706, 3
  %v1794 = vsel %vm1051, %v1793, %v1792
  %v1795 = vrot.slane %v1712, 2
  %v1796 = vsel %vm1054, %v1795, %v1794
  %v1797 = vrot.slane %v1718, 1
  %v1798 = vsel %vm1057, %v1797, %v1796
  %v1799 = vrot.slane %v1683, 7
  %v1800 = vsel %vm1039, %v1799, %v1677
  %v1801 = vrot.slane %v1689, 6
  %v1802 = vsel %vm1042, %v1801, %v1800
  %v1803 = vrot.slane %v1695, 5
  %v1804 = vsel %vm1045, %v1803, %v1802
  %v1805 = vrot.slane %v1701, 4
  %v1806 = vsel %vm1048, %v1805, %v1804
  %v1807 = vrot.slane %v1707, 3
  %v1808 = vsel %vm1051, %v1807, %v1806
  %v1809 = vrot.slane %v1713, 2
  %v1810 = vsel %vm1054, %v1809, %v1808
  %v1811 = vrot.slane %v1719, 1
  %v1812 = vsel %vm1057, %v1811, %v1810
  %v1813 = vrot.slane %v1684, 7
  %v1814 = vsel %vm1039, %v1813, %v1678
  %v1815 = vrot.slane %v1690, 6
  %v1816 = vsel %vm1042, %v1815, %v1814
  %v1817 = vrot.slane %v1696, 5
  %v1818 = vsel %vm1045, %v1817, %v1816
  %v1819 = vrot.slane %v1702, 4
  %v1820 = vsel %vm1048, %v1819, %v1818
  %v1821 = vrot.slane %v1708, 3
  %v1822 = vsel %vm1051, %v1821, %v1820
  %v1823 = vrot.slane %v1714, 2
  %v1824 = vsel %vm1054, %v1823, %v1822
  %v1825 = vrot.slane %v1720, 1
  %v1826 = vsel %vm1057, %v1825, %v1824
  %v1827 = vrot.slane %v1685, 7
  %v1828 = vsel %vm1039, %v1827, %v1679
  %v1829 = vrot.slane %v1691, 6
  %v1830 = vsel %vm1042, %v1829, %v1828
  %v1831 = vrot.slane %v1697, 5
  %v1832 = vsel %vm1045, %v1831, %v1830
  %v1833 = vrot.slane %v1703, 4
  %v1834 = vsel %vm1048, %v1833, %v1832
  %v1835 = vrot.slane %v1709, 3
  %v1836 = vsel %vm1051, %v1835, %v1834
  %v1837 = vrot.slane %v1715, 2
  %v1838 = vsel %vm1054, %v1837, %v1836
  %v1839 = vrot.slane %v1721, 1
  %v1840 = vsel %vm1057, %v1839, %v1838
  %v1841 = vrot.slane %v1686, 7
  %v1842 = vsel %vm1039, %v1841, %v1680
  %v1843 = vrot.slane %v1692, 6
  %v1844 = vsel %vm1042, %v1843, %v1842
  %v1845 = vrot.slane %v1698, 5
  %v1846 = vsel %vm1045, %v1845, %v1844
  %v1847 = vrot.slane %v1704, 4
  %v1848 = vsel %vm1048, %v1847, %v1846
  %v1849 = vrot.slane %v1710, 3
  %v1850 = vsel %vm1051, %v1849, %v1848
  %v1851 = vrot.slane %v1716, 2
  %v1852 = vsel %vm1054, %v1851, %v1850
  %v1853 = vrot.slane %v1722, 1
  %v1854 = vsel %vm1057, %v1853, %v1852
  %v1861 = vadd.f32 %v1619, %v1784
  %v1862 = vadd.f32 %v1620, %v1798
  %v1863 = vadd.f32 %v1621, %v1812
  %v1864 = vadd.f32 %v1622, %v1826
  %v1865 = vadd.f32 %v1623, %v1840
  %v1866 = vadd.f32 %v1624, %v1854
  %v1867 = vadd.f32 %v1861, %v1862
  %v1868 = vadd.f32 %v1867, %v1863
  %v1869 = vadd.f32 %v1868, %v1864
  %v1870 = vadd.f32 %v1869, %v1865
  %v1871 = vadd.f32 %v1870, %v1866
  %1872 = vadd.xlane.f32.xlu0 %v1871
  %v1873 = vpop.xlane.xlu0 %1872
  %v1874 = vrcp.pop 768.0
  %v1875 = vmul.f32 768.0, %v1874
  %v1876 = vsub.f32 1.0, %v1875
  %v1877 = vmul.f32 %v1874, %v1876
  %v1878 = vadd.f32 %v1874, %v1877
  %vm1879 = vweird.f32 %v1874
  %v1880 = vsel %vm1879, %v1874, %v1878
  %v1881 = vmul.f32 %v1873, %v1880
  %v1882 = vsub.f32 %v1861, %v1881
  %v1883 = vsub.f32 %v1862, %v1881
  %v1884 = vsub.f32 %v1863, %v1881
  %v1885 = vsub.f32 %v1864, %v1881
  %v1886 = vsub.f32 %v1865, %v1881
  %v1887 = vsub.f32 %v1866, %v1881
  %v1888 = vmul.f32 %v1882, %v1882
  %v1889 = vmul.f32 %v1883, %v1883
  %v1890 = vmul.f32 %v1884, %v1884
  %v1891 = vmul.f32 %v1885, %v1885
  %v1892 = vmul.f32 %v1886, %v1886
  %v1893 = vmul.f32 %v1887, %v1887
  %v1894 = vadd.f32 %v1888, %v1889
  %v1895 = vadd.f32 %v1894, %v1890
  %v1896 = vadd.f32 %v1895, %v1891
  %v1897 = vadd.f32 %v1896, %v1892
  %v1898 = vadd.f32 %v1897, %v1893
  %1899 = vadd.xlane.f32.xlu0 %v1898
  %v1900 = vpop.xlane.xlu0 %1899
  %v1901 = vmul.f32 %v1900, %v1880
  %v1902 = vadd.f32 %v1901, 1e-12
  %v1903 = vrsqrt.pop %v1902
  %v1904 = vmul.f32 %v1903, %v1902
  %v1905 = vmul.f32 %v1904, %v1903
  %v1906 = vmul.f32 0.5, %v1905
  %v1907 = vsub.f32 1.5, %v1906
  %v1908 = vmul.f32 %v1903, %v1907
  %vm1909 = vweird.f32 %v1902
  %vm1910 = vweird.f32 %v1903
  %vm1911 = vmor %vm1909, %vm1910
  %v1912 = vsel %vm1911, %v1903, %v1908
  %v1913 = vmul.f32 %v1882, %v1912
  %v1914 = vmul.f32 %v1883, %v1912
  %v1915 = vmul.f32 %v1884, %v1912
  %v1916 = vmul.f32 %v1885, %v1912
  %v1917 = vmul.f32 %v1886, %v1912
  %v1918 = vmul.f32 %v1887, %v1912
  %v1919 = vld [vmem:[%s4] sm:$0x3f]
  %v1921 = vperm.slane %v1919, 0
  %v1922 = vperm.slane %v1919, 1
  %v1923 = vperm.slane %v1919, 2
  %v1924 = vperm.slane %v1919, 3
  %v1925 = vperm.slane %v1919, 4
  %v1926 = vperm.slane %v1919, 5
  %v1933 = vmul.f32 %v1913, %v1921
  %v1934 = vmul.f32 %v1914, %v1922
  %v1935 = vmul.f32 %v1915, %v1923
  %v1936 = vmul.f32 %v1916, %v1924
  %v1937 = vmul.f32 %v1917, %v1925
  %v1938 = vmul.f32 %v1918, %v1926
  %v1939 = vld [vmem:[%s5] sm:$0x3f]
  %v1941 = vperm.slane %v1939, 0
  %v1942 = vperm.slane %v1939, 1
  %v1943 = vperm.slane %v1939, 2
  %v1944 = vperm.slane %v1939, 3
  %v1945 = vperm.slane %v1939, 4
  %v1946 = vperm.slane %v1939, 5
  %v1953 = vadd.f32 %v1933, %v1941
  %v1954 = vadd.f32 %v1934, %v1942
  %v1955 = vadd.f32 %v1935, %v1943
  %v1956 = vadd.f32 %v1936, %v1944
  %v1957 = vadd.f32 %v1937, %v1945
  %v1958 = vadd.f32 %v1938, %v1946
  %v1959 = vld [vmem:[%s1] sm:$0xff]
  %v1960 = vld [vmem:[%s7] sm:$0x3]
  %v1961 = vpack.c.bf16 %v1953, %v1953
  %v1962 = vpack.c.bf16 %v1954, %v1954
  %v1963 = vpack.c.bf16 %v1955, %v1955
  %v1964 = vpack.c.bf16 %v1956, %v1956
  %v1965 = vpack.c.bf16 %v1957, %v1957
  %v1966 = vpack.c.bf16 %v1958, %v1958
  %v1967 = vld [vmem:[%s6] sm:$0xf]
  %v1968 = vld [vmem:[%s6 + $0x4] sm:$0xf]
  %v1969 = vld [vmem:[%s6 + $0x8] sm:$0xf]
  %v1970 = vld [vmem:[%s6 + $0xc] sm:$0xf]
  %v1971 = vld [vmem:[%s6 + $0x10] sm:$0xf]
  %v1972 = vld [vmem:[%s6 + $0x14] sm:$0xf]
  %v1973 = vld [vmem:[%s6 + $0x18] sm:$0xf]
  %v1974 = vld [vmem:[%s6 + $0x1c] sm:$0xf]
  %v1975 = vld [vmem:[%s6 + $0x20] sm:$0xf]
  %v1976 = vld [vmem:[%s6 + $0x24] sm:$0xf]
  %v1977 = vld [vmem:[%s6 + $0x28] sm:$0xf]
  %v1978 = vld [vmem:[%s6 + $0x2c] sm:$0xf]
  %v1979 = vld [vmem:[%s6 + $0x30] sm:$0xf]
  %v1980 = vld [vmem:[%s6 + $0x34] sm:$0xf]
  %v1981 = vld [vmem:[%s6 + $0x38] sm:$0xf]
  %v1982 = vld [vmem:[%s6 + $0x3c] sm:$0xf]
  %v1983 = vld [vmem:[%s6 + $0x40] sm:$0xf]
  %v1984 = vld [vmem:[%s6 + $0x44] sm:$0xf]
  %v1985 = vld [vmem:[%s6 + $0x48] sm:$0xf]
  %v1986 = vld [vmem:[%s6 + $0x4c] sm:$0xf]
  %v1987 = vld [vmem:[%s6 + $0x50] sm:$0xf]
  %v1988 = vld [vmem:[%s6 + $0x54] sm:$0xf]
  %v1989 = vld [vmem:[%s6 + $0x58] sm:$0xf]
  %v1990 = vld [vmem:[%s6 + $0x5c] sm:$0xf]
  %v1991 = vld [vmem:[%s6 + $0x60] sm:$0xf]
  %v1992 = vld [vmem:[%s6 + $0x64] sm:$0xf]
  %v1993 = vld [vmem:[%s6 + $0x68] sm:$0xf]
  %v1994 = vld [vmem:[%s6 + $0x6c] sm:$0xf]
  %v1995 = vld [vmem:[%s6 + $0x70] sm:$0xf]
  %v1996 = vld [vmem:[%s6 + $0x74] sm:$0xf]
  %v1997 = vld [vmem:[%s6 + $0x78] sm:$0xf]
  %v1998 = vld [vmem:[%s6 + $0x7c] sm:$0xf]
  %v1999 = vld [vmem:[%s6 + $0x80] sm:$0xf]
  %v2000 = vld [vmem:[%s6 + $0x84] sm:$0xf]
  %v2001 = vld [vmem:[%s6 + $0x88] sm:$0xf]
  %v2002 = vld [vmem:[%s6 + $0x8c] sm:$0xf]
  %v2003 = vld [vmem:[%s6 + $0x90] sm:$0xf]
  %v2004 = vld [vmem:[%s6 + $0x94] sm:$0xf]
  %v2005 = vld [vmem:[%s6 + $0x98] sm:$0xf]
  %v2006 = vld [vmem:[%s6 + $0x9c] sm:$0xf]
  %v2007 = vld [vmem:[%s6 + $0xa0] sm:$0xf]
  %v2008 = vld [vmem:[%s6 + $0xa4] sm:$0xf]
  %v2009 = vld [vmem:[%s6 + $0xa8] sm:$0xf]
  %v2010 = vld [vmem:[%s6 + $0xac] sm:$0xf]
  %v2011 = vld [vmem:[%s6 + $0xb0] sm:$0xf]
  %v2012 = vld [vmem:[%s6 + $0xb4] sm:$0xf]
  %v2013 = vld [vmem:[%s6 + $0xb8] sm:$0xf]
  %v2014 = vld [vmem:[%s6 + $0xbc] sm:$0xf]
  %v2015 = vld [vmem:[%s6 + $0xc0] sm:$0xf]
  %v2016 = vld [vmem:[%s6 + $0xc4] sm:$0xf]
  %v2017 = vld [vmem:[%s6 + $0xc8] sm:$0xf]
  %v2018 = vld [vmem:[%s6 + $0xcc] sm:$0xf]
  %v2019 = vld [vmem:[%s6 + $0xd0] sm:$0xf]
  %v2020 = vld [vmem:[%s6 + $0xd4] sm:$0xf]
  %v2021 = vld [vmem:[%s6 + $0xd8] sm:$0xf]
  %v2022 = vld [vmem:[%s6 + $0xdc] sm:$0xf]
  %v2023 = vld [vmem:[%s6 + $0xe0] sm:$0xf]
  %v2024 = vld [vmem:[%s6 + $0xe4] sm:$0xf]
  %v2025 = vld [vmem:[%s6 + $0xe8] sm:$0xf]
  %v2026 = vld [vmem:[%s6 + $0xec] sm:$0xf]
  %v2027 = vld [vmem:[%s6 + $0xf0] sm:$0xf]
  %v2028 = vld [vmem:[%s6 + $0xf4] sm:$0xf]
  %v2029 = vld [vmem:[%s6 + $0xf8] sm:$0xf]
  %v2030 = vld [vmem:[%s6 + $0xfc] sm:$0xf]
  %v2031 = vld [vmem:[%s6 + $0x100] sm:$0xf]
  %v2032 = vld [vmem:[%s6 + $0x104] sm:$0xf]
  %v2033 = vld [vmem:[%s6 + $0x108] sm:$0xf]
  %v2034 = vld [vmem:[%s6 + $0x10c] sm:$0xf]
  %v2035 = vld [vmem:[%s6 + $0x110] sm:$0xf]
  %v2036 = vld [vmem:[%s6 + $0x114] sm:$0xf]
  %v2037 = vld [vmem:[%s6 + $0x118] sm:$0xf]
  %v2038 = vld [vmem:[%s6 + $0x11c] sm:$0xf]
  %v2039 = vld [vmem:[%s6 + $0x120] sm:$0xf]
  %v2040 = vld [vmem:[%s6 + $0x124] sm:$0xf]
  %v2041 = vld [vmem:[%s6 + $0x128] sm:$0xf]
  %v2042 = vld [vmem:[%s6 + $0x12c] sm:$0xf]
  %v2043 = vld [vmem:[%s6 + $0x130] sm:$0xf]
  %v2044 = vld [vmem:[%s6 + $0x134] sm:$0xf]
  %v2045 = vld [vmem:[%s6 + $0x138] sm:$0xf]
  %v2046 = vld [vmem:[%s6 + $0x13c] sm:$0xf]
  %v2047 = vld [vmem:[%s6 + $0x140] sm:$0xf]
  %v2048 = vld [vmem:[%s6 + $0x144] sm:$0xf]
  %v2049 = vld [vmem:[%s6 + $0x148] sm:$0xf]
  %v2050 = vld [vmem:[%s6 + $0x14c] sm:$0xf]
  %v2051 = vld [vmem:[%s6 + $0x150] sm:$0xf]
  %v2052 = vld [vmem:[%s6 + $0x154] sm:$0xf]
  %v2053 = vld [vmem:[%s6 + $0x158] sm:$0xf]
  %v2054 = vld [vmem:[%s6 + $0x15c] sm:$0xf]
  %v2055 = vld [vmem:[%s6 + $0x160] sm:$0xf]
  %v2056 = vld [vmem:[%s6 + $0x164] sm:$0xf]
  %v2057 = vld [vmem:[%s6 + $0x168] sm:$0xf]
  %v2058 = vld [vmem:[%s6 + $0x16c] sm:$0xf]
  %v2059 = vld [vmem:[%s6 + $0x170] sm:$0xf]
  %v2060 = vld [vmem:[%s6 + $0x174] sm:$0xf]
  %v2061 = vld [vmem:[%s6 + $0x178] sm:$0xf]
  %v2062 = vld [vmem:[%s6 + $0x17c] sm:$0xf]
  %2064 = vset.pattern.permute.xlu0 0
  %2065 = vperm.xlu0 %2064, %v1959
  %v2066 = vpop.permute.xlu0 %2065
  %v2068 = vperm.slane %v1960, 0
  %v2069 = vmul.f32 %v2066, %v2068
  %v2166 = vunpack.c.l.b16 %v1967
  %v2167 = vunpack.c.l.b16 %v1968
  %v2168 = vunpack.c.l.b16 %v1969
  %v2169 = vunpack.c.l.b16 %v1970
  %v2170 = vunpack.c.l.b16 %v1971
  %v2171 = vunpack.c.l.b16 %v1972
  %v2172 = vunpack.c.l.b16 %v1973
  %v2173 = vunpack.c.l.b16 %v1974
  %v2174 = vunpack.c.l.b16 %v1975
  %v2175 = vunpack.c.l.b16 %v1976
  %v2176 = vunpack.c.l.b16 %v1977
  %v2177 = vunpack.c.l.b16 %v1978
  %v2178 = vunpack.c.l.b16 %v1979
  %v2179 = vunpack.c.l.b16 %v1980
  %v2180 = vunpack.c.l.b16 %v1981
  %v2181 = vunpack.c.l.b16 %v1982
  %v2182 = vunpack.c.l.b16 %v1983
  %v2183 = vunpack.c.l.b16 %v1984
  %v2184 = vunpack.c.l.b16 %v1985
  %v2185 = vunpack.c.l.b16 %v1986
  %v2186 = vunpack.c.l.b16 %v1987
  %v2187 = vunpack.c.l.b16 %v1988
  %v2188 = vunpack.c.l.b16 %v1989
  %v2189 = vunpack.c.l.b16 %v1990
  %v2190 = vunpack.c.l.b16 %v1991
  %v2191 = vunpack.c.l.b16 %v1992
  %v2192 = vunpack.c.l.b16 %v1993
  %v2193 = vunpack.c.l.b16 %v1994
  %v2194 = vunpack.c.l.b16 %v1995
  %v2195 = vunpack.c.l.b16 %v1996
  %v2196 = vunpack.c.l.b16 %v1997
  %v2197 = vunpack.c.l.b16 %v1998
  %v2198 = vunpack.c.l.b16 %v1999
  %v2199 = vunpack.c.l.b16 %v2000
  %v2200 = vunpack.c.l.b16 %v2001
  %v2201 = vunpack.c.l.b16 %v2002
  %v2202 = vunpack.c.l.b16 %v2003
  %v2203 = vunpack.c.l.b16 %v2004
  %v2204 = vunpack.c.l.b16 %v2005
  %v2205 = vunpack.c.l.b16 %v2006
  %v2206 = vunpack.c.l.b16 %v2007
  %v2207 = vunpack.c.l.b16 %v2008
  %v2208 = vunpack.c.l.b16 %v2009
  %v2209 = vunpack.c.l.b16 %v2010
  %v2210 = vunpack.c.l.b16 %v2011
  %v2211 = vunpack.c.l.b16 %v2012
  %v2212 = vunpack.c.l.b16 %v2013
  %v2213 = vunpack.c.l.b16 %v2014
  %v2214 = vunpack.c.l.b16 %v2015
  %v2215 = vunpack.c.l.b16 %v2016
  %v2216 = vunpack.c.l.b16 %v2017
  %v2217 = vunpack.c.l.b16 %v2018
  %v2218 = vunpack.c.l.b16 %v2019
  %v2219 = vunpack.c.l.b16 %v2020
  %v2220 = vunpack.c.l.b16 %v2021
  %v2221 = vunpack.c.l.b16 %v2022
  %v2222 = vunpack.c.l.b16 %v2023
  %v2223 = vunpack.c.l.b16 %v2024
  %v2224 = vunpack.c.l.b16 %v2025
  %v2225 = vunpack.c.l.b16 %v2026
  %v2226 = vunpack.c.l.b16 %v2027
  %v2227 = vunpack.c.l.b16 %v2028
  %v2228 = vunpack.c.l.b16 %v2029
  %v2229 = vunpack.c.l.b16 %v2030
  %v2230 = vunpack.c.l.b16 %v2031
  %v2231 = vunpack.c.l.b16 %v2032
  %v2232 = vunpack.c.l.b16 %v2033
  %v2233 = vunpack.c.l.b16 %v2034
  %v2234 = vunpack.c.l.b16 %v2035
  %v2235 = vunpack.c.l.b16 %v2036
  %v2236 = vunpack.c.l.b16 %v2037
  %v2237 = vunpack.c.l.b16 %v2038
  %v2238 = vunpack.c.l.b16 %v2039
  %v2239 = vunpack.c.l.b16 %v2040
  %v2240 = vunpack.c.l.b16 %v2041
  %v2241 = vunpack.c.l.b16 %v2042
  %v2242 = vunpack.c.l.b16 %v2043
  %v2243 = vunpack.c.l.b16 %v2044
  %v2244 = vunpack.c.l.b16 %v2045
  %v2245 = vunpack.c.l.b16 %v2046
  %v2246 = vunpack.c.l.b16 %v2047
  %v2247 = vunpack.c.l.b16 %v2048
  %v2248 = vunpack.c.l.b16 %v2049
  %v2249 = vunpack.c.l.b16 %v2050
  %v2250 = vunpack.c.l.b16 %v2051
  %v2251 = vunpack.c.l.b16 %v2052
  %v2252 = vunpack.c.l.b16 %v2053
  %v2253 = vunpack.c.l.b16 %v2054
  %v2254 = vunpack.c.l.b16 %v2055
  %v2255 = vunpack.c.l.b16 %v2056
  %v2256 = vunpack.c.l.b16 %v2057
  %v2257 = vunpack.c.l.b16 %v2058
  %v2258 = vunpack.c.l.b16 %v2059
  %v2259 = vunpack.c.l.b16 %v2060
  %v2260 = vunpack.c.l.b16 %v2061
  %v2261 = vunpack.c.l.b16 %v2062
  %v2262 = vpack.c.b16 %v2167, %v2166
  %v2263 = vpack.c.b16 %v2169, %v2168
  %v2264 = vpack.c.b16 %v2171, %v2170
  %v2265 = vpack.c.b16 %v2173, %v2172
  %v2266 = vpack.c.b16 %v2175, %v2174
  %v2267 = vpack.c.b16 %v2177, %v2176
  %v2268 = vpack.c.b16 %v2179, %v2178
  %v2269 = vpack.c.b16 %v2181, %v2180
  %v2270 = vpack.c.b16 %v2183, %v2182
  %v2271 = vpack.c.b16 %v2185, %v2184
  %v2272 = vpack.c.b16 %v2187, %v2186
  %v2273 = vpack.c.b16 %v2189, %v2188
  %v2274 = vpack.c.b16 %v2191, %v2190
  %v2275 = vpack.c.b16 %v2193, %v2192
  %v2276 = vpack.c.b16 %v2195, %v2194
  %v2277 = vpack.c.b16 %v2197, %v2196
  %v2278 = vpack.c.b16 %v2199, %v2198
  %v2279 = vpack.c.b16 %v2201, %v2200
  %v2280 = vpack.c.b16 %v2203, %v2202
  %v2281 = vpack.c.b16 %v2205, %v2204
  %v2282 = vpack.c.b16 %v2207, %v2206
  %v2283 = vpack.c.b16 %v2209, %v2208
  %v2284 = vpack.c.b16 %v2211, %v2210
  %v2285 = vpack.c.b16 %v2213, %v2212
  %v2286 = vpack.c.b16 %v2215, %v2214
  %v2287 = vpack.c.b16 %v2217, %v2216
  %v2288 = vpack.c.b16 %v2219, %v2218
  %v2289 = vpack.c.b16 %v2221, %v2220
  %v2290 = vpack.c.b16 %v2223, %v2222
  %v2291 = vpack.c.b16 %v2225, %v2224
  %v2292 = vpack.c.b16 %v2227, %v2226
  %v2293 = vpack.c.b16 %v2229, %v2228
  %v2294 = vpack.c.b16 %v2231, %v2230
  %v2295 = vpack.c.b16 %v2233, %v2232
  %v2296 = vpack.c.b16 %v2235, %v2234
  %v2297 = vpack.c.b16 %v2237, %v2236
  %v2298 = vpack.c.b16 %v2239, %v2238
  %v2299 = vpack.c.b16 %v2241, %v2240
  %v2300 = vpack.c.b16 %v2243, %v2242
  %v2301 = vpack.c.b16 %v2245, %v2244
  %v2302 = vpack.c.b16 %v2247, %v2246
  %v2303 = vpack.c.b16 %v2249, %v2248
  %v2304 = vpack.c.b16 %v2251, %v2250
  %v2305 = vpack.c.b16 %v2253, %v2252
  %v2306 = vpack.c.b16 %v2255, %v2254
  %v2307 = vpack.c.b16 %v2257, %v2256
  %v2308 = vpack.c.b16 %v2259, %v2258
  %v2309 = vpack.c.b16 %v2261, %v2260
  %2358 = vmatpush.bf16.msra.mxu0 %v2269
  %2359 = vmatpush.bf16.msra.mxu0 %v2268
  %2360 = vmatpush.bf16.msra.mxu0 %v2267
  %2361 = vmatpush.bf16.msra.mxu0 %v2266
  %2362 = vmatpush.bf16.msra.mxu0 %v2265
  %2363 = vmatpush.bf16.msra.mxu0 %v2264
  %2364 = vmatpush.bf16.msra.mxu0 %v2263
  %2365 = vmatpush.bf16.msra.mxu0 %v2262
  %2366 = vmatmul.bf16.gmra.mxu0 %v1961
  %v2367 = vpop.f32.mrf.mxu0
  %v2368 = vadd.f32 %v2069, %v2367
  %v2369 = vpop.f32.mrf.mxu0
  %2370 = vdwg.mxu0
  %2371 = vmatpush.bf16.msra.mxu0 %v2277
  %2372 = vmatpush.bf16.msra.mxu0 %v2276
  %2373 = vmatpush.bf16.msra.mxu0 %v2275
  %2374 = vmatpush.bf16.msra.mxu0 %v2274
  %2375 = vmatpush.bf16.msra.mxu0 %v2273
  %2376 = vmatpush.bf16.msra.mxu0 %v2272
  %2377 = vmatpush.bf16.msra.mxu0 %v2271
  %2378 = vmatpush.bf16.msra.mxu0 %v2270
  %2379 = vmatmul.bf16.gmra.mxu0 %v1962
  %v2380 = vpop.f32.mrf.mxu0
  %v2381 = vadd.f32 %v2368, %v2380
  %v2382 = vpop.f32.mrf.mxu0
  %2383 = vdwg.mxu0
  %2384 = vmatpush.bf16.msra.mxu0 %v2285
  %2385 = vmatpush.bf16.msra.mxu0 %v2284
  %2386 = vmatpush.bf16.msra.mxu0 %v2283
  %2387 = vmatpush.bf16.msra.mxu0 %v2282
  %2388 = vmatpush.bf16.msra.mxu0 %v2281
  %2389 = vmatpush.bf16.msra.mxu0 %v2280
  %2390 = vmatpush.bf16.msra.mxu0 %v2279
  %2391 = vmatpush.bf16.msra.mxu0 %v2278
  %2392 = vmatmul.bf16.gmra.mxu0 %v1963
  %v2393 = vpop.f32.mrf.mxu0
  %v2394 = vadd.f32 %v2381, %v2393
  %v2395 = vpop.f32.mrf.mxu0
  %2396 = vdwg.mxu0
  %2397 = vmatpush.bf16.msra.mxu0 %v2293
  %2398 = vmatpush.bf16.msra.mxu0 %v2292
  %2399 = vmatpush.bf16.msra.mxu0 %v2291
  %2400 = vmatpush.bf16.msra.mxu0 %v2290
  %2401 = vmatpush.bf16.msra.mxu0 %v2289
  %2402 = vmatpush.bf16.msra.mxu0 %v2288
  %2403 = vmatpush.bf16.msra.mxu0 %v2287
  %2404 = vmatpush.bf16.msra.mxu0 %v2286
  %2405 = vmatmul.bf16.gmra.mxu0 %v1964
  %v2406 = vpop.f32.mrf.mxu0
  %v2407 = vadd.f32 %v2394, %v2406
  %v2408 = vpop.f32.mrf.mxu0
  %2409 = vdwg.mxu0
  %2410 = vmatpush.bf16.msra.mxu0 %v2301
  %2411 = vmatpush.bf16.msra.mxu0 %v2300
  %2412 = vmatpush.bf16.msra.mxu0 %v2299
  %2413 = vmatpush.bf16.msra.mxu0 %v2298
  %2414 = vmatpush.bf16.msra.mxu0 %v2297
  %2415 = vmatpush.bf16.msra.mxu0 %v2296
  %2416 = vmatpush.bf16.msra.mxu0 %v2295
  %2417 = vmatpush.bf16.msra.mxu0 %v2294
  %2418 = vmatmul.bf16.gmra.mxu0 %v1965
  %v2419 = vpop.f32.mrf.mxu0
  %v2420 = vadd.f32 %v2407, %v2419
  %v2421 = vpop.f32.mrf.mxu0
  %2422 = vdwg.mxu0
  %2423 = vmatpush.bf16.msra.mxu0 %v2309
  %2424 = vmatpush.bf16.msra.mxu0 %v2308
  %2425 = vmatpush.bf16.msra.mxu0 %v2307
  %2426 = vmatpush.bf16.msra.mxu0 %v2306
  %2427 = vmatpush.bf16.msra.mxu0 %v2305
  %2428 = vmatpush.bf16.msra.mxu0 %v2304
  %2429 = vmatpush.bf16.msra.mxu0 %v2303
  %2430 = vmatpush.bf16.msra.mxu0 %v2302
  %2431 = vmatmul.bf16.gmra.mxu0 %v1966
  %v2432 = vpop.f32.mrf.mxu0
  %v2433 = vadd.f32 %v2420, %v2432
  %v2434 = vpop.f32.mrf.mxu0
  %2435 = vdwg.mxu0
  %2436 = vset.pattern.permute.xlu0 1
  %2437 = vperm.xlu0 %2436, %v1959
  %v2438 = vpop.permute.xlu0 %2437
  %v2440 = vperm.slane %v1960, 1
  %v2441 = vmul.f32 %v2438, %v2440
  %v2442 = vadd.f32 %v2433, %v2441
  %v2443 = vld [vmem:[%s8] sm:$0x1]
  %v2445 = vperm.slane %v2443, 0
  %v2447 = vadd.f32 %v2442, %v2445
  %v2448 = vmul.f32 %v2447, 0.5
  %v2449 = vmul.f32 %v2447, 0.70710677
  %v2450 = vmul.f32 %v2449, %v2449
  %v2451 = vmin.f32 16.0, %v2450
  %v2452 = vmul.f32 %v2451, 2.1237322e-06
  %v2453 = vadd.f32 %v2452, 0.00028619796
  %v2454 = vmul.f32 %v2451, %v2453
  %v2455 = vadd.f32 %v2454, 0.0036580483
  %v2456 = vmul.f32 %v2451, %v2455
  %v2457 = vadd.f32 %v2456, 0.05243302
  %v2458 = vmul.f32 %v2451, %v2457
  %v2459 = vadd.f32 %v2458, 0.18741608
  %v2460 = vmul.f32 %v2451, %v2459
  %v2461 = vadd.f32 %v2460, 1.1283791
  %v2462 = vmul.f32 %v2449, %v2461
  %v2463 = vmul.f32 %v2451, 3.8918573e-05
  %v2464 = vadd.f32 %v2463, 0.001143296
  %v2465 = vmul.f32 %v2451, %v2464
  %v2466 = vadd.f32 %v2465, 0.014752088
  %v2467 = vmul.f32 %v2451, %v2466
  %v2468 = vadd.f32 %v2467, 0.112945676
  %v2469 = vmul.f32 %v2451, %v2468
  %v2470 = vadd.f32 %v2469, 0.4994258
  %v2471 = vmul.f32 %v2451, %v2470
  %v2472 = vadd.f32 %v2471, 1.0
  %v2473 = vrcp.pop %v2472
  %v2474 = vmul.f32 %v2472, %v2473
  %v2475 = vsub.f32 1.0, %v2474
  %v2476 = vmul.f32 %v2473, %v2475
  %v2477 = vadd.f32 %v2473, %v2476
  %vm2478 = vweird.f32 %v2472
  %vm2479 = vweird.f32 %v2473
  %vm2480 = vmor %vm2478, %vm2479
  %v2481 = vsel %vm2480, %v2473, %v2477
  %v2482 = vand.u32 2147483647, %v2472
  %vm2483 = vcmp.eq.f32.partialorder %v2482, 8.507059e+37
  %v2484 = vand.u32 %v2472, 2147483648
  %v2485 = vor.u32 1.1754944e-38, %v2484
  %v2486 = vsel %vm2483, %v2485, %v2481
  %v2487 = vmul.f32 %v2462, %v2486
  %v2488 = vmin.f32 %v2487, 1.0
  %v2489 = vmax.f32 %v2488, -1.0
  %v2490 = vadd.f32 %v2489, 1.0
  %v2491 = vmul.f32 %v2448, %v2490
  %v2492 = vld [vmem:[%s9] sm:$0x1]
  %v2494 = vperm.slane %v2492, 0
  %v2496 = vmul.f32 %v2491, %v2494
  %vm2497 = vcmask 523264
  %v2498 = vsel %vm2497, %v2496, 0.0
  %2499 = vadd.xlane.f32.xlu0 %v2498
  %v2500 = vpop.xlane.xlu0 %2499
  %v2501 = vld [vmem:[#allocation2] sm:$0x1]
  %v2503 = vperm.slane %v2501, 0
  %v2505 = vadd.f32 %v2500, %v2503
  %2507 = vset.pattern.permute.xlu0 0
  %2508 = vperm.xlu0 %2507, %v2505
  %v2509 = vpop.permute.xlu0 %2508
  %2511 = vst [vmem:[%s11] sm:$0xff] %v2509
  // Predicated region
  $region46: #{net_forward.1} parent=0 // pred_check
    _
  $region47: #{net_forward.1} parent=0 // pred_check_branch
    %2513 = sbr.rel (0) target = $region49
  $region48: #{net_forward.1} parent=0 // pred_region
    _
  $region49: #{net_forward.1} parent=0 // pred_fallthru
    _
  // Predicated region
  $region50: #{net_forward.1} parent=0 // pred_check
    _
  $region51: #{net_forward.1} parent=0 // pred_check_branch
    %2515 = sbr.rel (0) target = $region53
  $region52: #{net_forward.1} parent=0 // pred_region
    _
  $region53: #{net_forward.1} parent=0 // pred_fallthru
    _

</llo_original>
